<compile_context>
chip_gen: v7x
topology: tpu7x:2x2x1
jax: 0.10.0
libtpu: 0.0.40
codegen_flags: <defaults>
</compile_context>

<pallas_src>
import functools
from math import sqrt

import jax
import jax.numpy as jnp
from jax.experimental import pallas as pl
from jax.experimental.pallas import tpu as pltpu


def _hardswish(x):
    # torch.nn.Hardswish: x * relu6(x + 3) / 6
    return x * jnp.clip(x + 3.0, 0.0, 6.0) * (1.0 / 6.0)


# ------------------------------ fused kernel --------------------------------

def _feedforward_kernel(x_ref, w1_ref, b1_ref, wdw_ref, bdw_ref,
                        wpw_ref, bpw_ref, w2_ref, b2_ref,
                        o_ref, pad_ref, *, h, w):
    hid = w1_ref.shape[1]
    n = h * w
    m = x_ref.shape[0]            # = b_tile * n  (batch folded into matmul M)
    bt = m // n

    # ---- 1x1 conv dim -> hid, + Hardswish ------------------------------------
    # bf16 operands -> MXU bf16 rate, f32 accumulation, f32 epilogue.
    x = x_ref[...].astype(jnp.bfloat16)                       # (m, dim)
    u = jnp.dot(x, w1_ref[...], preferred_element_type=jnp.float32)
    u = _hardswish(u + b1_ref[...])                           # (m, hid) f32

    # ---- depthwise 3x3, stride 1, padding 1 (in-kernel zero halo) ------------
    # Zero ONLY the 1-wide border each step (interior fully overwritten below).
    # Deliberately not guarded by program_id==0: with a "parallel" grid axis
    # each TensorCore owns a private scratch and may never execute step 0.
    zrow = jnp.zeros((bt, 1, w + 2, hid), jnp.float32)
    pad_ref[:, 0:1, :, :] = zrow
    pad_ref[:, h + 1:h + 2, :, :] = zrow
    zcol = jnp.zeros((bt, h + 2, 1, hid), jnp.float32)
    pad_ref[:, :, 0:1, :] = zcol
    pad_ref[:, :, w + 1:w + 2, :] = zcol

    pad_ref[:, 1:h + 1, 1:w + 1, :] = u.reshape(bt, h, w, hid)

    wt = wdw_ref[...]                                          # (9, hid) f32
    acc = jnp.zeros((bt, h, w, hid), jnp.float32)
    for dh in range(3):
        for dw in range(3):
            tap = pad_ref[:, dh:dh + h, dw:dw + w, :]          # (bt, h, w, hid)
            k = dh * 3 + dw
            acc = acc + tap * wt[k:k + 1, :]                   # bcast (1, hid)
    acc = acc + bdw_ref[...]                                   # depthwise bias
    v = acc.reshape(m, hid)

    # ---- pointwise 1x1 hid -> hid, + Hardswish --------------------------------
    v = jnp.dot(v.astype(jnp.bfloat16), wpw_ref[...],
                preferred_element_type=jnp.float32)
    v = _hardswish(v + bpw_ref[...])

    # (Dropout: identity in eval mode.)

    # ---- final 1x1 conv hid -> dim --------------------------------------------
    y = jnp.dot(v.astype(jnp.bfloat16), w2_ref[...],
                preferred_element_type=jnp.float32)
    y = y + b2_ref[...]
    o_ref[...] = y.astype(o_ref.dtype)


def _rep_spec(shape):
    """Full-array block, same block every grid step (weights stay VMEM-resident)."""
    nd = len(shape)
    return pl.BlockSpec(shape, lambda i, _nd=nd: (0,) * _nd)


def _pick_b_tile(b, n, dim, hid):
    """Batch-fold heuristic: whole batch per step; b/2 on 2-TensorCore chips so
    both TCs stay busy; capped so f32 intermediates fit comfortably in VMEM."""
    two_tc = False
    try:
        kind = jax.devices()[0].device_kind.lower()
        two_tc = ("v7" in kind) or ("7x" in kind)   # v7x: 2 TensorCores / chip
    except Exception:
        pass
    bt = b // 2 if (two_tc and b % 2 == 0) else b
    # Rough f32 bytes per fused token row held live (u + acc + halo + y).
    row_bytes = 4 * (3 * hid + dim)
    while bt > 1 and bt % 2 == 0 and bt * n * row_bytes > (8 << 20):
        bt //= 2
    return bt


def feedforward(x, params, b_tile=None):
    """Fused FeedForward.  x: (b, n, dim) with n = h*w a perfect square."""
    b, n, dim = x.shape
    h = w = int(round(sqrt(n)))
    assert h * w == n, "token count must form a square spatial grid"
    hid = params["w1"].shape[1]

    bt = b_tile if b_tile is not None else _pick_b_tile(b, n, dim, hid)
    assert b % bt == 0, "batch must be divisible by the batch tile"
    grid = (b // bt,)

    # Weights in bf16 (MXU operands), biases / depthwise taps in f32 — done
    # once here so the kernel has no per-step casts on resident weights.
    w1 = params["w1"].astype(jnp.bfloat16)
    wpw = params["wpw"].astype(jnp.bfloat16)
    w2 = params["w2"].astype(jnp.bfloat16)
    b1 = params["b1"].reshape(1, hid).astype(jnp.float32)
    wdw = params["wdw"].reshape(9, hid).astype(jnp.float32)
    bdw = params["bdw"].reshape(1, hid).astype(jnp.float32)
    bpw = params["bpw"].reshape(1, hid).astype(jnp.float32)
    b2 = params["b2"].reshape(1, dim).astype(jnp.float32)

    # Fold batch into the token (M) axis: one lane-dense (bt*n, dim) slab per
    # grid step (free metadata reshape in HBM, fills MXU rows / sublanes).
    x2 = x.reshape(b * n, dim)
    io_spec = pl.BlockSpec((bt * n, dim), lambda i: (i, 0))

    out2d = pl.pallas_call(
        functools.partial(_feedforward_kernel, h=h, w=w),
        out_shape=jax.ShapeDtypeStruct((b * n, dim), x.dtype),
        grid=grid,
        in_specs=[
            io_spec,                    # x  (bt*n, dim)
            _rep_spec((dim, hid)),      # w1   (1x1 conv dim -> hid), bf16
            _rep_spec((1, hid)),        # b1
            _rep_spec((9, hid)),        # wdw  (depthwise 3x3 taps), f32
            _rep_spec((1, hid)),        # bdw
            _rep_spec((hid, hid)),      # wpw  (pointwise 1x1), bf16
            _rep_spec((1, hid)),        # bpw
            _rep_spec((hid, dim)),      # w2   (1x1 conv hid -> dim), bf16
            _rep_spec((1, dim)),        # b2
        ],
        out_specs=io_spec,
        scratch_shapes=[pltpu.VMEM((bt, h + 2, w + 2, hid), jnp.float32)],
        compiler_params=pltpu.CompilerParams(
            dimension_semantics=("parallel",),
            vmem_limit_bytes=32 * 1024 * 1024),
    )(x2, w1, b1, wdw, bdw, wpw, bpw, w2, b2)

    return out2d.reshape(b, n, dim)


# ------------------------- params + pure-JAX reference ----------------------

def init_params(key, dim, hid):
    ks = jax.random.split(key, 4)
    s = 0.05
    return {
        "w1":  s * jax.random.normal(ks[0], (dim, hid), jnp.float32),
        "b1":  s * jax.random.normal(jax.random.fold_in(ks[0], 1), (hid,), jnp.float32),
        "wdw": s * jax.random.normal(ks[1], (3, 3, hid), jnp.float32),
        "bdw": s * jax.random.normal(jax.random.fold_in(ks[1], 1), (hid,), jnp.float32),
        "wpw": s * jax.random.normal(ks[2], (hid, hid), jnp.float32),
        "bpw": s * jax.random.normal(jax.random.fold_in(ks[2], 1), (hid,), jnp.float32),
        "w2":  s * jax.random.normal(ks[3], (hid, dim), jnp.float32),
        "b2":  s * jax.random.normal(jax.random.fold_in(ks[3], 1), (dim,), jnp.float32),
    }


def feedforward_ref(x, params):
    """Pure-JAX f32 reference mirroring the PyTorch FeedForward (eval mode)."""
    b, n, dim = x.shape
    h = w = int(round(sqrt(n)))
    hid = params["w1"].shape[1]
    hi = jax.lax.Precision.HIGHEST
    u = _hardswish(jnp.dot(x, params["w1"], precision=hi) + params["b1"])
    u = u.reshape(b, h, w, hid)
    up = jnp.pad(u, ((0, 0), (1, 1), (1, 1), (0, 0)))
    acc = jnp.zeros((b, h, w, hid), jnp.float32)
    for dh in range(3):
        for dw in range(3):
            acc = acc + up[:, dh:dh + h, dw:dw + w, :] * params["wdw"][dh, dw]
    acc = acc + params["bdw"]
    v = acc.reshape(b, n, hid)
    v = _hardswish(jnp.dot(v, params["wpw"], precision=hi) + params["bpw"])
    return jnp.dot(v, params["w2"], precision=hi) + params["b2"]


# ---------------------------------- main -------------------------------------

if __name__ == "__main__":
    b, h, w = 2, 8, 8            # 64 tokens on an 8x8 patch grid
    dim, hid = 64, 128           # FeedForward(dim=64, hidden_dim=128)
    n = h * w

    kx, kp = jax.random.split(jax.random.PRNGKey(0))
    x = jax.random.normal(kx, (b, n, dim), jnp.float32)
    params = init_params(kp, dim, hid)

    fwd = jax.jit(feedforward)
    out = fwd(x, params)
    jax.block_until_ready(out)

    assert out.shape == (b, n, dim)
    assert bool(jnp.all(jnp.isfinite(out)))
    ref = feedforward_ref(x, params)
    # bf16 MXU operands with f32 accumulation -> loosened tolerance vs. the
    # Precision.HIGHEST f32 reference (expected max-abs error is a few 1e-3).
    err = float(jnp.max(jnp.abs(out - ref)))
    assert err < 2.5e-2, f"max abs err {err}"
    print("KERNEL_OK")
</pallas_src>

<mosaic_0001>
module attributes {stable_mosaic.version = 11 : i64} {
  func.func @_feedforward_kernel(%arg0: i32, %arg1: memref<128x64xf32, #tpu.memory_space<vmem>>, %arg2: memref<64x128xbf16, #tpu.memory_space<vmem>>, %arg3: memref<1x128xf32, #tpu.memory_space<vmem>>, %arg4: memref<9x128xf32, #tpu.memory_space<vmem>>, %arg5: memref<1x128xf32, #tpu.memory_space<vmem>>, %arg6: memref<128x128xbf16, #tpu.memory_space<vmem>>, %arg7: memref<1x128xf32, #tpu.memory_space<vmem>>, %arg8: memref<128x64xbf16, #tpu.memory_space<vmem>>, %arg9: memref<1x64xf32, #tpu.memory_space<vmem>>, %arg10: memref<128x64xf32, #tpu.memory_space<vmem>>, %arg11: memref<2x10x10x128xf32, #tpu.memory_space<vmem>>) attributes {dimension_semantics = [#tpu.dimension_semantics<parallel>], iteration_bounds = array<i64: 1>, scalar_prefetch = 0 : i64, scratch_operands = 1 : i64, tpu.core_type = #tpu.core_type<tc>, window_params = [{transform_indices = @transform_0, window_bounds = array<i64: 128, 64>}, {pipeline_mode = #tpu.pipeline_mode<synchronous>, transform_indices = @transform_1, window_bounds = array<i64: 64, 128>}, {pipeline_mode = #tpu.pipeline_mode<synchronous>, transform_indices = @transform_2, window_bounds = array<i64: 1, 128>}, {pipeline_mode = #tpu.pipeline_mode<synchronous>, transform_indices = @transform_3, window_bounds = array<i64: 9, 128>}, {pipeline_mode = #tpu.pipeline_mode<synchronous>, transform_indices = @transform_4, window_bounds = array<i64: 1, 128>}, {pipeline_mode = #tpu.pipeline_mode<synchronous>, transform_indices = @transform_5, window_bounds = array<i64: 128, 128>}, {pipeline_mode = #tpu.pipeline_mode<synchronous>, transform_indices = @transform_6, window_bounds = array<i64: 1, 128>}, {pipeline_mode = #tpu.pipeline_mode<synchronous>, transform_indices = @transform_7, window_bounds = array<i64: 128, 64>}, {pipeline_mode = #tpu.pipeline_mode<synchronous>, transform_indices = @transform_8, window_bounds = array<i64: 1, 64>}, {transform_indices = @transform_9, window_bounds = array<i64: 128, 64>}]} {
    %c0 = arith.constant 0 : index
    %c0_0 = arith.constant 0 : index
    %0 = vector.load %arg1[%c0, %c0_0] : memref<128x64xf32, #tpu.memory_space<vmem>>, vector<128x64xf32>
    %1 = arith.truncf %0 : vector<128x64xf32> to vector<128x64xbf16>
    %c0_1 = arith.constant 0 : index
    %c0_2 = arith.constant 0 : index
    %2 = vector.load %arg2[%c0_1, %c0_2] : memref<64x128xbf16, #tpu.memory_space<vmem>>, vector<64x128xbf16>
    %cst = arith.constant dense<0.000000e+00> : vector<128x128xf32>
    %3 = tpu.matmul %1, %2, %cst {dimension_numbers = #tpu.dot_dimension_numbers<[1], [0], [0], [1], [0, 0, 1, 1], [], []>} : vector<128x64xbf16>, vector<64x128xbf16>, vector<128x128xf32> -> vector<128x128xf32>
    %c0_3 = arith.constant 0 : index
    %c0_4 = arith.constant 0 : index
    %4 = vector.load %arg3[%c0_3, %c0_4] : memref<1x128xf32, #tpu.memory_space<vmem>>, vector<1x128xf32>
    %5 = vector.broadcast %4 : vector<1x128xf32> to vector<128x128xf32>
    %6 = arith.addf %3, %5 : vector<128x128xf32>
    %cst_5 = arith.constant 3.000000e+00 : f32
    %7 = vector.broadcast %cst_5 : f32 to vector<128x128xf32>
    %8 = arith.addf %6, %7 : vector<128x128xf32>
    %cst_6 = arith.constant 0.000000e+00 : f32
    %cst_7 = arith.constant 6.000000e+00 : f32
    %9 = vector.broadcast %cst_6 : f32 to vector<128x128xf32>
    %10 = arith.maximumf %9, %8 : vector<128x128xf32>
    %11 = vector.broadcast %cst_7 : f32 to vector<128x128xf32>
    %12 = arith.minimumf %11, %10 : vector<128x128xf32>
    %13 = arith.mulf %6, %12 : vector<128x128xf32>
    %cst_8 = arith.constant 0.166666672 : f32
    %14 = vector.broadcast %cst_8 : f32 to vector<128x128xf32>
    %15 = arith.mulf %13, %14 : vector<128x128xf32>
    %cst_9 = arith.constant 0.000000e+00 : f32
    %16 = vector.broadcast %cst_9 : f32 to vector<2x1x10x128xf32>
    %c0_10 = arith.constant 0 : index
    %c0_11 = arith.constant 0 : index
    %c0_12 = arith.constant 0 : index
    %c0_13 = arith.constant 0 : index
    %17 = vector.load %arg11[%c0_10, %c0_11, %c0_12, %c0_13] : memref<2x10x10x128xf32, #tpu.memory_space<vmem>>, vector<2x1x10x128xf32>
    tpu.vector_store %arg11[%c0_10, %c0_11, %c0_12, %c0_13], %16 {strides = array<i32>} : memref<2x10x10x128xf32, #tpu.memory_space<vmem>>, vector<2x1x10x128xf32>,
    %c0_14 = arith.constant 0 : index
    %c9 = arith.constant 9 : index
    %c0_15 = arith.constant 0 : index
    %c0_16 = arith.constant 0 : index
    %18 = vector.load %arg11[%c0_14, %c9, %c0_15, %c0_16] : memref<2x10x10x128xf32, #tpu.memory_space<vmem>>, vector<2x1x10x128xf32>
    tpu.vector_store %arg11[%c0_14, %c9, %c0_15, %c0_16], %16 {strides = array<i32>} : memref<2x10x10x128xf32, #tpu.memory_space<vmem>>, vector<2x1x10x128xf32>,
    %cst_17 = arith.constant 0.000000e+00 : f32
    %19 = vector.broadcast %cst_17 : f32 to vector<2x10x1x128xf32>
    %c0_18 = arith.constant 0 : index
    %c0_19 = arith.constant 0 : index
    %c0_20 = arith.constant 0 : index
    %c0_21 = arith.constant 0 : index
    %20 = vector.load %arg11[%c0_18, %c0_19, %c0_20, %c0_21] : memref<2x10x10x128xf32, #tpu.memory_space<vmem>>, vector<2x10x1x128xf32>
    tpu.vector_store %arg11[%c0_18, %c0_19, %c0_20, %c0_21], %19 {strides = array<i32>} : memref<2x10x10x128xf32, #tpu.memory_space<vmem>>, vector<2x10x1x128xf32>,
    %c0_22 = arith.constant 0 : index
    %c0_23 = arith.constant 0 : index
    %c9_24 = arith.constant 9 : index
    %c0_25 = arith.constant 0 : index
    %21 = vector.load %arg11[%c0_22, %c0_23, %c9_24, %c0_25] : memref<2x10x10x128xf32, #tpu.memory_space<vmem>>, vector<2x10x1x128xf32>
    tpu.vector_store %arg11[%c0_22, %c0_23, %c9_24, %c0_25], %19 {strides = array<i32>} : memref<2x10x10x128xf32, #tpu.memory_space<vmem>>, vector<2x10x1x128xf32>,
    %22 = vector.shape_cast %15 : vector<128x128xf32> to vector<2x8x8x128xf32>
    %c0_26 = arith.constant 0 : index
    %c1 = arith.constant 1 : index
    %c1_27 = arith.constant 1 : index
    %c0_28 = arith.constant 0 : index
    %23 = vector.load %arg11[%c0_26, %c1, %c1_27, %c0_28] : memref<2x10x10x128xf32, #tpu.memory_space<vmem>>, vector<2x8x8x128xf32>
    tpu.vector_store %arg11[%c0_26, %c1, %c1_27, %c0_28], %22 {strides = array<i32>} : memref<2x10x10x128xf32, #tpu.memory_space<vmem>>, vector<2x8x8x128xf32>,
    %c0_29 = arith.constant 0 : index
    %c0_30 = arith.constant 0 : index
    %24 = vector.load %arg4[%c0_29, %c0_30] : memref<9x128xf32, #tpu.memory_space<vmem>>, vector<9x128xf32>
    %cst_31 = arith.constant 0.000000e+00 : f32
    %25 = vector.broadcast %cst_31 : f32 to vector<2x8x8x128xf32>
    %c0_32 = arith.constant 0 : index
    %c0_33 = arith.constant 0 : index
    %c0_34 = arith.constant 0 : index
    %c0_35 = arith.constant 0 : index
    %26 = vector.load %arg11[%c0_32, %c0_33, %c0_34, %c0_35] : memref<2x10x10x128xf32, #tpu.memory_space<vmem>>, vector<2x8x8x128xf32>
    %27 = vector.extract_strided_slice %24 {offsets = [0, 0], sizes = [1, 128], strides = [1, 1]} : vector<9x128xf32> to vector<1x128xf32>
    %28 = vector.shape_cast %27 : vector<1x128xf32> to vector<1x1x1x128xf32>
    %29 = vector.broadcast %28 : vector<1x1x1x128xf32> to vector<2x8x8x128xf32>
    %30 = arith.mulf %26, %29 : vector<2x8x8x128xf32>
    %31 = arith.addf %25, %30 : vector<2x8x8x128xf32>
    %c0_36 = arith.constant 0 : index
    %c0_37 = arith.constant 0 : index
    %c1_38 = arith.constant 1 : index
    %c0_39 = arith.constant 0 : index
    %32 = vector.load %arg11[%c0_36, %c0_37, %c1_38, %c0_39] : memref<2x10x10x128xf32, #tpu.memory_space<vmem>>, vector<2x8x8x128xf32>
    %33 = vector.extract_strided_slice %24 {offsets = [1, 0], sizes = [1, 128], strides = [1, 1]} : vector<9x128xf32> to vector<1x128xf32>
    %34 = vector.shape_cast %33 : vector<1x128xf32> to vector<1x1x1x128xf32>
    %35 = vector.broadcast %34 : vector<1x1x1x128xf32> to vector<2x8x8x128xf32>
    %36 = arith.mulf %32, %35 : vector<2x8x8x128xf32>
    %37 = arith.addf %31, %36 : vector<2x8x8x128xf32>
    %c0_40 = arith.constant 0 : index
    %c0_41 = arith.constant 0 : index
    %c2 = arith.constant 2 : index
    %c0_42 = arith.constant 0 : index
    %38 = vector.load %arg11[%c0_40, %c0_41, %c2, %c0_42] : memref<2x10x10x128xf32, #tpu.memory_space<vmem>>, vector<2x8x8x128xf32>
    %39 = vector.extract_strided_slice %24 {offsets = [2, 0], sizes = [1, 128], strides = [1, 1]} : vector<9x128xf32> to vector<1x128xf32>
    %40 = vector.shape_cast %39 : vector<1x128xf32> to vector<1x1x1x128xf32>
    %41 = vector.broadcast %40 : vector<1x1x1x128xf32> to vector<2x8x8x128xf32>
    %42 = arith.mulf %38, %41 : vector<2x8x8x128xf32>
    %43 = arith.addf %37, %42 : vector<2x8x8x128xf32>
    %c0_43 = arith.constant 0 : index
    %c1_44 = arith.constant 1 : index
    %c0_45 = arith.constant 0 : index
    %c0_46 = arith.constant 0 : index
    %44 = vector.load %arg11[%c0_43, %c1_44, %c0_45, %c0_46] : memref<2x10x10x128xf32, #tpu.memory_space<vmem>>, vector<2x8x8x128xf32>
    %45 = vector.extract_strided_slice %24 {offsets = [3, 0], sizes = [1, 128], strides = [1, 1]} : vector<9x128xf32> to vector<1x128xf32>
    %46 = vector.shape_cast %45 : vector<1x128xf32> to vector<1x1x1x128xf32>
    %47 = vector.broadcast %46 : vector<1x1x1x128xf32> to vector<2x8x8x128xf32>
    %48 = arith.mulf %44, %47 : vector<2x8x8x128xf32>
    %49 = arith.addf %43, %48 : vector<2x8x8x128xf32>
    %c0_47 = arith.constant 0 : index
    %c1_48 = arith.constant 1 : index
    %c1_49 = arith.constant 1 : index
    %c0_50 = arith.constant 0 : index
    %50 = vector.load %arg11[%c0_47, %c1_48, %c1_49, %c0_50] : memref<2x10x10x128xf32, #tpu.memory_space<vmem>>, vector<2x8x8x128xf32>
    %51 = vector.extract_strided_slice %24 {offsets = [4, 0], sizes = [1, 128], strides = [1, 1]} : vector<9x128xf32> to vector<1x128xf32>
    %52 = vector.shape_cast %51 : vector<1x128xf32> to vector<1x1x1x128xf32>
    %53 = vector.broadcast %52 : vector<1x1x1x128xf32> to vector<2x8x8x128xf32>
    %54 = arith.mulf %50, %53 : vector<2x8x8x128xf32>
    %55 = arith.addf %49, %54 : vector<2x8x8x128xf32>
    %c0_51 = arith.constant 0 : index
    %c1_52 = arith.constant 1 : index
    %c2_53 = arith.constant 2 : index
    %c0_54 = arith.constant 0 : index
    %56 = vector.load %arg11[%c0_51, %c1_52, %c2_53, %c0_54] : memref<2x10x10x128xf32, #tpu.memory_space<vmem>>, vector<2x8x8x128xf32>
    %57 = vector.extract_strided_slice %24 {offsets = [5, 0], sizes = [1, 128], strides = [1, 1]} : vector<9x128xf32> to vector<1x128xf32>
    %58 = vector.shape_cast %57 : vector<1x128xf32> to vector<1x1x1x128xf32>
    %59 = vector.broadcast %58 : vector<1x1x1x128xf32> to vector<2x8x8x128xf32>
    %60 = arith.mulf %56, %59 : vector<2x8x8x128xf32>
    %61 = arith.addf %55, %60 : vector<2x8x8x128xf32>
    %c0_55 = arith.constant 0 : index
    %c2_56 = arith.constant 2 : index
    %c0_57 = arith.constant 0 : index
    %c0_58 = arith.constant 0 : index
    %62 = vector.load %arg11[%c0_55, %c2_56, %c0_57, %c0_58] : memref<2x10x10x128xf32, #tpu.memory_space<vmem>>, vector<2x8x8x128xf32>
    %63 = vector.extract_strided_slice %24 {offsets = [6, 0], sizes = [1, 128], strides = [1, 1]} : vector<9x128xf32> to vector<1x128xf32>
    %64 = vector.shape_cast %63 : vector<1x128xf32> to vector<1x1x1x128xf32>
    %65 = vector.broadcast %64 : vector<1x1x1x128xf32> to vector<2x8x8x128xf32>
    %66 = arith.mulf %62, %65 : vector<2x8x8x128xf32>
    %67 = arith.addf %61, %66 : vector<2x8x8x128xf32>
    %c0_59 = arith.constant 0 : index
    %c2_60 = arith.constant 2 : index
    %c1_61 = arith.constant 1 : index
    %c0_62 = arith.constant 0 : index
    %68 = vector.load %arg11[%c0_59, %c2_60, %c1_61, %c0_62] : memref<2x10x10x128xf32, #tpu.memory_space<vmem>>, vector<2x8x8x128xf32>
    %69 = vector.extract_strided_slice %24 {offsets = [7, 0], sizes = [1, 128], strides = [1, 1]} : vector<9x128xf32> to vector<1x128xf32>
    %70 = vector.shape_cast %69 : vector<1x128xf32> to vector<1x1x1x128xf32>
    %71 = vector.broadcast %70 : vector<1x1x1x128xf32> to vector<2x8x8x128xf32>
    %72 = arith.mulf %68, %71 : vector<2x8x8x128xf32>
    %73 = arith.addf %67, %72 : vector<2x8x8x128xf32>
    %c0_63 = arith.constant 0 : index
    %c2_64 = arith.constant 2 : index
    %c2_65 = arith.constant 2 : index
    %c0_66 = arith.constant 0 : index
    %74 = vector.load %arg11[%c0_63, %c2_64, %c2_65, %c0_66] : memref<2x10x10x128xf32, #tpu.memory_space<vmem>>, vector<2x8x8x128xf32>
    %75 = vector.extract_strided_slice %24 {offsets = [8, 0], sizes = [1, 128], strides = [1, 1]} : vector<9x128xf32> to vector<1x128xf32>
    %76 = vector.shape_cast %75 : vector<1x128xf32> to vector<1x1x1x128xf32>
    %77 = vector.broadcast %76 : vector<1x1x1x128xf32> to vector<2x8x8x128xf32>
    %78 = arith.mulf %74, %77 : vector<2x8x8x128xf32>
    %79 = arith.addf %73, %78 : vector<2x8x8x128xf32>
    %c0_67 = arith.constant 0 : index
    %c0_68 = arith.constant 0 : index
    %80 = vector.load %arg5[%c0_67, %c0_68] : memref<1x128xf32, #tpu.memory_space<vmem>>, vector<1x128xf32>
    %81 = vector.shape_cast %80 : vector<1x128xf32> to vector<1x1x1x128xf32>
    %82 = vector.broadcast %81 : vector<1x1x1x128xf32> to vector<2x8x8x128xf32>
    %83 = arith.addf %79, %82 : vector<2x8x8x128xf32>
    %84 = vector.shape_cast %83 : vector<2x8x8x128xf32> to vector<128x128xf32>
    %85 = arith.truncf %84 : vector<128x128xf32> to vector<128x128xbf16>
    %c0_69 = arith.constant 0 : index
    %c0_70 = arith.constant 0 : index
    %86 = vector.load %arg6[%c0_69, %c0_70] : memref<128x128xbf16, #tpu.memory_space<vmem>>, vector<128x128xbf16>
    %cst_71 = arith.constant dense<0.000000e+00> : vector<128x128xf32>
    %87 = tpu.matmul %85, %86, %cst_71 {dimension_numbers = #tpu.dot_dimension_numbers<[1], [0], [0], [1], [0, 0, 1, 1], [], []>} : vector<128x128xbf16>, vector<128x128xbf16>, vector<128x128xf32> -> vector<128x128xf32>
    %c0_72 = arith.constant 0 : index
    %c0_73 = arith.constant 0 : index
    %88 = vector.load %arg7[%c0_72, %c0_73] : memref<1x128xf32, #tpu.memory_space<vmem>>, vector<1x128xf32>
    %89 = vector.broadcast %88 : vector<1x128xf32> to vector<128x128xf32>
    %90 = arith.addf %87, %89 : vector<128x128xf32>
    %cst_74 = arith.constant 3.000000e+00 : f32
    %91 = vector.broadcast %cst_74 : f32 to vector<128x128xf32>
    %92 = arith.addf %90, %91 : vector<128x128xf32>
    %cst_75 = arith.constant 0.000000e+00 : f32
    %cst_76 = arith.constant 6.000000e+00 : f32
    %93 = vector.broadcast %cst_75 : f32 to vector<128x128xf32>
    %94 = arith.maximumf %93, %92 : vector<128x128xf32>
    %95 = vector.broadcast %cst_76 : f32 to vector<128x128xf32>
    %96 = arith.minimumf %95, %94 : vector<128x128xf32>
    %97 = arith.mulf %90, %96 : vector<128x128xf32>
    %cst_77 = arith.constant 0.166666672 : f32
    %98 = vector.broadcast %cst_77 : f32 to vector<128x128xf32>
    %99 = arith.mulf %97, %98 : vector<128x128xf32>
    %100 = arith.truncf %99 : vector<128x128xf32> to vector<128x128xbf16>
    %c0_78 = arith.constant 0 : index
    %c0_79 = arith.constant 0 : index
    %101 = vector.load %arg8[%c0_78, %c0_79] : memref<128x64xbf16, #tpu.memory_space<vmem>>, vector<128x64xbf16>
    %cst_80 = arith.constant dense<0.000000e+00> : vector<128x64xf32>
    %102 = tpu.matmul %100, %101, %cst_80 {dimension_numbers = #tpu.dot_dimension_numbers<[1], [0], [0], [1], [0, 0, 1, 1], [], []>} : vector<128x128xbf16>, vector<128x64xbf16>, vector<128x64xf32> -> vector<128x64xf32>
    %c0_81 = arith.constant 0 : index
    %c0_82 = arith.constant 0 : index
    %103 = vector.load %arg9[%c0_81, %c0_82] : memref<1x64xf32, #tpu.memory_space<vmem>>, vector<1x64xf32>
    %104 = vector.broadcast %103 : vector<1x64xf32> to vector<128x64xf32>
    %105 = arith.addf %102, %104 : vector<128x64xf32>
    %c0_83 = arith.constant 0 : index
    %c0_84 = arith.constant 0 : index
    %106 = vector.load %arg10[%c0_83, %c0_84] : memref<128x64xf32, #tpu.memory_space<vmem>>, vector<128x64xf32>
    tpu.vector_store %arg10[%c0_83, %c0_84], %105 {strides = array<i32>} : memref<128x64xf32, #tpu.memory_space<vmem>>, vector<128x64xf32>,
    return
  }
  func.func @transform_0(%arg0: i32) -> (i32, i32) {
    %c0_i32 = arith.constant 0 : i32
    %c0_i32_0 = arith.constant 0 : i32
    return %arg0, %c0_i32 : i32, i32
  }
  func.func @transform_1(%arg0: i32) -> (i32, i32) {
    %c0_i32 = arith.constant 0 : i32
    %c0_i32_0 = arith.constant 0 : i32
    %c0_i32_1 = arith.constant 0 : i32
    return %c0_i32, %c0_i32_0 : i32, i32
  }
  func.func @transform_2(%arg0: i32) -> (i32, i32) {
    %c0_i32 = arith.constant 0 : i32
    %c0_i32_0 = arith.constant 0 : i32
    %c0_i32_1 = arith.constant 0 : i32
    return %c0_i32, %c0_i32_0 : i32, i32
  }
  func.func @transform_3(%arg0: i32) -> (i32, i32) {
    %c0_i32 = arith.constant 0 : i32
    %c0_i32_0 = arith.constant 0 : i32
    %c0_i32_1 = arith.constant 0 : i32
    return %c0_i32, %c0_i32_0 : i32, i32
  }
  func.func @transform_4(%arg0: i32) -> (i32, i32) {
    %c0_i32 = arith.constant 0 : i32
    %c0_i32_0 = arith.constant 0 : i32
    %c0_i32_1 = arith.constant 0 : i32
    return %c0_i32, %c0_i32_0 : i32, i32
  }
  func.func @transform_5(%arg0: i32) -> (i32, i32) {
    %c0_i32 = arith.constant 0 : i32
    %c0_i32_0 = arith.constant 0 : i32
    %c0_i32_1 = arith.constant 0 : i32
    return %c0_i32, %c0_i32_0 : i32, i32
  }
  func.func @transform_6(%arg0: i32) -> (i32, i32) {
    %c0_i32 = arith.constant 0 : i32
    %c0_i32_0 = arith.constant 0 : i32
    %c0_i32_1 = arith.constant 0 : i32
    return %c0_i32, %c0_i32_0 : i32, i32
  }
  func.func @transform_7(%arg0: i32) -> (i32, i32) {
    %c0_i32 = arith.constant 0 : i32
    %c0_i32_0 = arith.constant 0 : i32
    %c0_i32_1 = arith.constant 0 : i32
    return %c0_i32, %c0_i32_0 : i32, i32
  }
  func.func @transform_8(%arg0: i32) -> (i32, i32) {
    %c0_i32 = arith.constant 0 : i32
    %c0_i32_0 = arith.constant 0 : i32
    %c0_i32_1 = arith.constant 0 : i32
    return %c0_i32, %c0_i32_0 : i32, i32
  }
  func.func @transform_9(%arg0: i32) -> (i32, i32) {
    %c0_i32 = arith.constant 0 : i32
    %c0_i32_0 = arith.constant 0 : i32
    return %arg0, %c0_i32 : i32, i32
  }
}

</mosaic_0001>

<llo_original>
// kernel: feedforward.1
$region0: #{feedforward.1}
  #allocation0 [shape = 'u32[]', space=smem, size = 0x4, offset = 0x4, fixed_abs, tag = 'smem constant byte address 0x4 - core index']
  #allocation1 [shape = 'u32[144,128]{1,0:T(1,128)}', space=vmem, size = 0x12000, scoped, tag = 'internal scratch']
  #allocation2 [shape = 'f32[2,10,10,128]{3,2,1,0:T(8,128)}', space=vmem, size = 0x28000, scoped, tag = 'scratch operand']
  %s0 = inlined_call_operand.vmem [shape: f32[128,64], index: 0, kind: input, shape index: {}]
  %s1 = inlined_call_operand.vmem [shape: bf16[64,128], index: 1, kind: input, shape index: {}]
  %s2 = inlined_call_operand.vmem [shape: f32[1,128], index: 2, kind: input, shape index: {}]
  %s3 = inlined_call_operand.vmem [shape: f32[9,128], index: 3, kind: input, shape index: {}]
  %s4 = inlined_call_operand.vmem [shape: f32[1,128], index: 4, kind: input, shape index: {}]
  %s5 = inlined_call_operand.vmem [shape: bf16[128,128], index: 5, kind: input, shape index: {}]
  %s6 = inlined_call_operand.vmem [shape: f32[1,128], index: 6, kind: input, shape index: {}]
  %s7 = inlined_call_operand.vmem [shape: bf16[128,64], index: 7, kind: input, shape index: {}]
  %s8 = inlined_call_operand.vmem [shape: f32[1,64], index: 8, kind: input, shape index: {}]
  %s9 = inlined_call_operand.hbm [shape: f32[128,64], index: 9, kind: output, shape index: {}]
  %s10 = sld [smem:[#allocation0]]
  $region46: #{feedforward.1} parent=0
    _
  %s12 = ssub.s32 1, %s10
  %s13 = scalar_select 0, %s12, %s10
  $region1: #{feedforward.1} parent=0
    #allocation3 [shape = 'u8[65536]{0}', space=vmem, size = 0x10000, scoped, tag = 'output window, operand 0, single buffered']
    #allocation4 [shape = 's32[1]{0}', space=sflag, size = 0x4, scoped, tag = 'scoped memory for feedforward.1']
    %14 = vsyncpa [#allocation4], 0
    // Predicated region
    $region2: #{feedforward.1} parent=1 // pred_check
      _
    $region3: #{feedforward.1} parent=1 // pred_check_branch
      %16 = sbr.rel (0) target = $region5
    $region4: #{feedforward.1} parent=1 // pred_region
      _
    $region5: #{feedforward.1} parent=1 // pred_fallthru
      _
    // Predicated region
    $region6: #{feedforward.1} parent=1 // pred_check
      _
    $region7: #{feedforward.1} parent=1 // pred_check_branch
      %18 = sbr.rel (0) target = $region9
    $region8: #{feedforward.1} parent=1 // pred_region
      _
    $region9: #{feedforward.1} parent=1 // pred_fallthru
      _
    // Predicated region
    $region10: #{feedforward.1} parent=1 // pred_check
      _
    $region11: #{feedforward.1} parent=1 // pred_check_branch
      %20 = sbr.rel (0) target = $region13
    $region12: #{feedforward.1} parent=1 // pred_region
      _
    $region13: #{feedforward.1} parent=1 // pred_fallthru
      _
    // Predicated region
    $region14: #{feedforward.1} parent=1 // pred_check
      _
    $region15: #{feedforward.1} parent=1 // pred_check_branch
      %22 = sbr.rel (0) target = $region17
    $region16: #{feedforward.1} parent=1 // pred_region
      _
    $region17: #{feedforward.1} parent=1 // pred_fallthru
      _
    // Predicated region
    $region18: #{feedforward.1} parent=1 // pred_check
      _
    $region19: #{feedforward.1} parent=1 // pred_check_branch
      %24 = sbr.rel (0) target = $region21
    $region20: #{feedforward.1} parent=1 // pred_region
      _
    $region21: #{feedforward.1} parent=1 // pred_fallthru
      _
    // Predicated region
    $region22: #{feedforward.1} parent=1 // pred_check
      _
    $region23: #{feedforward.1} parent=1 // pred_check_branch
      %26 = sbr.rel (0) target = $region25
    $region24: #{feedforward.1} parent=1 // pred_region
      _
    $region25: #{feedforward.1} parent=1 // pred_fallthru
      _
    // Predicated region
    $region26: #{feedforward.1} parent=1 // pred_check
      _
    $region27: #{feedforward.1} parent=1 // pred_check_branch
      %28 = sbr.rel (0) target = $region29
    $region28: #{feedforward.1} parent=1 // pred_region
      _
    $region29: #{feedforward.1} parent=1 // pred_fallthru
      _
    // Predicated region
    $region30: #{feedforward.1} parent=1 // pred_check
      _
    $region31: #{feedforward.1} parent=1 // pred_check_branch
      %30 = sbr.rel (0) target = $region33
    $region32: #{feedforward.1} parent=1 // pred_region
      _
    $region33: #{feedforward.1} parent=1 // pred_fallthru
      _
    // Predicated region
    $region34: #{feedforward.1} parent=1 // pred_check
      _
    $region35: #{feedforward.1} parent=1 // pred_check_branch
      %32 = sbr.rel (0) target = $region37
    $region36: #{feedforward.1} parent=1 // pred_region
      _
    $region37: #{feedforward.1} parent=1 // pred_fallthru
      _
    %v34 = vld [vmem:[%s0] sm:$0xff]
    %v35 = vld [vmem:[%s0 + $0x8] sm:$0xff]
    %v36 = vld [vmem:[%s0 + $0x10] sm:$0xff]
    %v37 = vld [vmem:[%s0 + $0x18] sm:$0xff]
    %v38 = vld [vmem:[%s0 + $0x20] sm:$0xff]
    %v39 = vld [vmem:[%s0 + $0x28] sm:$0xff]
    %v40 = vld [vmem:[%s0 + $0x30] sm:$0xff]
    %v41 = vld [vmem:[%s0 + $0x38] sm:$0xff]
    %v42 = vld [vmem:[%s0 + $0x40] sm:$0xff]
    %v43 = vld [vmem:[%s0 + $0x48] sm:$0xff]
    %v44 = vld [vmem:[%s0 + $0x50] sm:$0xff]
    %v45 = vld [vmem:[%s0 + $0x58] sm:$0xff]
    %v46 = vld [vmem:[%s0 + $0x60] sm:$0xff]
    %v47 = vld [vmem:[%s0 + $0x68] sm:$0xff]
    %v48 = vld [vmem:[%s0 + $0x70] sm:$0xff]
    %v49 = vld [vmem:[%s0 + $0x78] sm:$0xff]
    %v50 = vpack.c.bf16 %v35, %v34
    %v51 = vpack.c.bf16 %v37, %v36
    %v52 = vpack.c.bf16 %v39, %v38
    %v53 = vpack.c.bf16 %v41, %v40
    %v54 = vpack.c.bf16 %v43, %v42
    %v55 = vpack.c.bf16 %v45, %v44
    %v56 = vpack.c.bf16 %v47, %v46
    %v57 = vpack.c.bf16 %v49, %v48
    %v58 = vld [vmem:[%s1] sm:$0xf]
    %v59 = vld [vmem:[%s1 + $0x4] sm:$0xf]
    %v60 = vld [vmem:[%s1 + $0x8] sm:$0xf]
    %v61 = vld [vmem:[%s1 + $0xc] sm:$0xf]
    %v62 = vld [vmem:[%s1 + $0x10] sm:$0xf]
    %v63 = vld [vmem:[%s1 + $0x14] sm:$0xf]
    %v64 = vld [vmem:[%s1 + $0x18] sm:$0xf]
    %v65 = vld [vmem:[%s1 + $0x1c] sm:$0xf]
    %v66 = vld [vmem:[%s2] sm:$0x1]
    %v68 = vlaneseq
    %v69 = vshrl.u32 %v68, 7
    %v70 = vsub.s32 0, %v69
    %v71 = vrot.slane %v66, %v70
    %v81 = vunpack.c.l.b16 %v58
    %v82 = vunpack.c.l.b16 %v59
    %v83 = vunpack.c.l.b16 %v60
    %v84 = vunpack.c.l.b16 %v61
    %v85 = vunpack.c.l.b16 %v62
    %v86 = vunpack.c.l.b16 %v63
    %v87 = vunpack.c.l.b16 %v64
    %v88 = vunpack.c.l.b16 %v65
    %v89 = vpack.c.b16 %v82, %v81
    %v90 = vpack.c.b16 %v84, %v83
    %v91 = vpack.c.b16 %v86, %v85
    %v92 = vpack.c.b16 %v88, %v87
    %vm97 = vcmask 523264
    %v99 = vsel %vm97, %v50, 0
    %v102 = vsel %vm97, %v51, 0
    %v105 = vsel %vm97, %v52, 0
    %v108 = vsel %vm97, %v53, 0
    %v111 = vsel %vm97, %v54, 0
    %v114 = vsel %vm97, %v55, 0
    %v117 = vsel %vm97, %v56, 0
    %v120 = vsel %vm97, %v57, 0
    %122 = vmatprep.subr.bf16.mxu0 0
    %123 = vmatpush1.bf16.msra.mxu0 %v89
    %124 = vmatprep.subr.bf16.mxu0 0
    %125 = vmatpush1.bf16.msra.mxu0 %v90
    %126 = vmatprep.subr.bf16.mxu0 0
    %127 = vmatpush1.bf16.msra.mxu0 %v91
    %128 = vmatprep.subr.bf16.mxu0 0
    %129 = vmatpush1.bf16.msra.mxu0 %v92
    %130 = vmatprep.subr.bf16.mxu0 0
    %131 = vmatpush1.bf16.msra.mxu0 0
    %132 = vmatprep.subr.bf16.mxu0 0
    %133 = vmatpush1.bf16.msra.mxu0 0
    %134 = vmatprep.subr.bf16.mxu0 0
    %135 = vmatpush1.bf16.msra.mxu0 0
    %136 = vmatprep.subr.bf16.mxu0 0
    %137 = vmatpush1.bf16.msra.mxu0 0
    %138 = vmatprep.subr.bf16.mxu0 0
    %139 = vmatpush1.bf16.msra.mxu0 0
    %140 = vmatprep.subr.bf16.mxu0 0
    %141 = vmatpush1.bf16.msra.mxu0 0
    %142 = vmatprep.subr.bf16.mxu0 0
    %143 = vmatpush1.bf16.msra.mxu0 0
    %144 = vmatprep.subr.bf16.mxu0 0
    %145 = vmatpush1.bf16.msra.mxu0 0
    %146 = vmatprep.subr.bf16.mxu0 0
    %147 = vmatpush1.bf16.msra.mxu0 0
    %148 = vmatprep.subr.bf16.mxu0 0
    %149 = vmatpush1.bf16.msra.mxu0 0
    %150 = vmatprep.subr.bf16.mxu0 0
    %151 = vmatpush1.bf16.msra.mxu0 0
    %152 = vmatprep.subr.bf16.mxu0 0
    %153 = vmatpush1.bf16.msra.mxu0 0
    %154 = vmatprep.mubr.bf16.mxu0 0
    %155 = vmatmul.mubr.bf16.gmra.mrb[0].mxu0 %v99
    %v156 = vpop.f32.mrb[0].mxu0
    %v157 = vadd.f32 %v71, %v156
    %v158 = vpop.f32.mrb[0].mxu0
    %v159 = vpop.f32.mrb[0].mxu0
    %v160 = vadd.f32 %v71, %v159
    %v161 = vpop.f32.mrb[0].mxu0
    %162 = vmatprep.mubr.bf16.mxu0 0
    %163 = vmatmul.mubr.bf16.gmra.mrb[0].mxu0 %v102
    %v164 = vpop.f32.mrb[0].mxu0
    %v165 = vadd.f32 %v71, %v164
    %v166 = vpop.f32.mrb[0].mxu0
    %v167 = vpop.f32.mrb[0].mxu0
    %v168 = vadd.f32 %v71, %v167
    %v169 = vpop.f32.mrb[0].mxu0
    %170 = vmatprep.mubr.bf16.mxu0 0
    %171 = vmatmul.mubr.bf16.gmra.mrb[0].mxu0 %v105
    %v172 = vpop.f32.mrb[0].mxu0
    %v173 = vadd.f32 %v71, %v172
    %v174 = vpop.f32.mrb[0].mxu0
    %v175 = vpop.f32.mrb[0].mxu0
    %v176 = vadd.f32 %v71, %v175
    %v177 = vpop.f32.mrb[0].mxu0
    %178 = vmatprep.mubr.bf16.mxu0 0
    %179 = vmatmul.mubr.bf16.gmra.mrb[0].mxu0 %v108
    %v180 = vpop.f32.mrb[0].mxu0
    %v181 = vadd.f32 %v71, %v180
    %v182 = vpop.f32.mrb[0].mxu0
    %v183 = vpop.f32.mrb[0].mxu0
    %v184 = vadd.f32 %v71, %v183
    %v185 = vpop.f32.mrb[0].mxu0
    %186 = vmatprep.mubr.bf16.mxu0 0
    %187 = vmatmul.mubr.bf16.gmra.mrb[0].mxu0 %v111
    %v188 = vpop.f32.mrb[0].mxu0
    %v189 = vadd.f32 %v71, %v188
    %v190 = vpop.f32.mrb[0].mxu0
    %v191 = vpop.f32.mrb[0].mxu0
    %v192 = vadd.f32 %v71, %v191
    %v193 = vpop.f32.mrb[0].mxu0
    %194 = vmatprep.mubr.bf16.mxu0 0
    %195 = vmatmul.mubr.bf16.gmra.mrb[0].mxu0 %v114
    %v196 = vpop.f32.mrb[0].mxu0
    %v197 = vadd.f32 %v71, %v196
    %v198 = vpop.f32.mrb[0].mxu0
    %v199 = vpop.f32.mrb[0].mxu0
    %v200 = vadd.f32 %v71, %v199
    %v201 = vpop.f32.mrb[0].mxu0
    %202 = vmatprep.mubr.bf16.mxu0 0
    %203 = vmatmul.mubr.bf16.gmra.mrb[0].mxu0 %v117
    %v204 = vpop.f32.mrb[0].mxu0
    %v205 = vadd.f32 %v71, %v204
    %v206 = vpop.f32.mrb[0].mxu0
    %v207 = vpop.f32.mrb[0].mxu0
    %v208 = vadd.f32 %v71, %v207
    %v209 = vpop.f32.mrb[0].mxu0
    %210 = vmatprep.mubr.bf16.mxu0 0
    %211 = vmatmul.mubr.bf16.gmra.mrb[0].mxu0 %v120
    %v212 = vpop.f32.mrb[0].mxu0
    %v213 = vadd.f32 %v71, %v212
    %v214 = vpop.f32.mrb[0].mxu0
    %v215 = vpop.f32.mrb[0].mxu0
    %v216 = vadd.f32 %v71, %v215
    %v217 = vpop.f32.mrb[0].mxu0
    %218 = vdwg.mxu0
    %v219 = vadd.f32 %v157, 3.0
    %v220 = vadd.f32 %v160, 3.0
    %v221 = vadd.f32 %v165, 3.0
    %v222 = vadd.f32 %v168, 3.0
    %v223 = vadd.f32 %v173, 3.0
    %v224 = vadd.f32 %v176, 3.0
    %v225 = vadd.f32 %v181, 3.0
    %v226 = vadd.f32 %v184, 3.0
    %v227 = vadd.f32 %v189, 3.0
    %v228 = vadd.f32 %v192, 3.0
    %v229 = vadd.f32 %v197, 3.0
    %v230 = vadd.f32 %v200, 3.0
    %v231 = vadd.f32 %v205, 3.0
    %v232 = vadd.f32 %v208, 3.0
    %v233 = vadd.f32 %v213, 3.0
    %v234 = vadd.f32 %v216, 3.0
    %v235 = vmax.f32 %v219, 0.0
    %v236 = vmax.f32 %v220, 0.0
    %v237 = vmax.f32 %v221, 0.0
    %v238 = vmax.f32 %v222, 0.0
    %v239 = vmax.f32 %v223, 0.0
    %v240 = vmax.f32 %v224, 0.0
    %v241 = vmax.f32 %v225, 0.0
    %v242 = vmax.f32 %v226, 0.0
    %v243 = vmax.f32 %v227, 0.0
    %v244 = vmax.f32 %v228, 0.0
    %v245 = vmax.f32 %v229, 0.0
    %v246 = vmax.f32 %v230, 0.0
    %v247 = vmax.f32 %v231, 0.0
    %v248 = vmax.f32 %v232, 0.0
    %v249 = vmax.f32 %v233, 0.0
    %v250 = vmax.f32 %v234, 0.0
    %v251 = vmin.f32 %v235, 6.0
    %v252 = vmin.f32 %v236, 6.0
    %v253 = vmin.f32 %v237, 6.0
    %v254 = vmin.f32 %v238, 6.0
    %v255 = vmin.f32 %v239, 6.0
    %v256 = vmin.f32 %v240, 6.0
    %v257 = vmin.f32 %v241, 6.0
    %v258 = vmin.f32 %v242, 6.0
    %v259 = vmin.f32 %v243, 6.0
    %v260 = vmin.f32 %v244, 6.0
    %v261 = vmin.f32 %v245, 6.0
    %v262 = vmin.f32 %v246, 6.0
    %v263 = vmin.f32 %v247, 6.0
    %v264 = vmin.f32 %v248, 6.0
    %v265 = vmin.f32 %v249, 6.0
    %v266 = vmin.f32 %v250, 6.0
    %v267 = vmul.f32 %v157, %v251
    %v268 = vmul.f32 %v160, %v252
    %v269 = vmul.f32 %v165, %v253
    %v270 = vmul.f32 %v168, %v254
    %v271 = vmul.f32 %v173, %v255
    %v272 = vmul.f32 %v176, %v256
    %v273 = vmul.f32 %v181, %v257
    %v274 = vmul.f32 %v184, %v258
    %v275 = vmul.f32 %v189, %v259
    %v276 = vmul.f32 %v192, %v260
    %v277 = vmul.f32 %v197, %v261
    %v278 = vmul.f32 %v200, %v262
    %v279 = vmul.f32 %v205, %v263
    %v280 = vmul.f32 %v208, %v264
    %v281 = vmul.f32 %v213, %v265
    %v282 = vmul.f32 %v216, %v266
    %v283 = vmul.f32 %v267, 0.16666667
    %v284 = vmul.f32 %v268, 0.16666667
    %v285 = vmul.f32 %v269, 0.16666667
    %v286 = vmul.f32 %v270, 0.16666667
    %v287 = vmul.f32 %v271, 0.16666667
    %v288 = vmul.f32 %v272, 0.16666667
    %v289 = vmul.f32 %v273, 0.16666667
    %v290 = vmul.f32 %v274, 0.16666667
    %v291 = vmul.f32 %v275, 0.16666667
    %v292 = vmul.f32 %v276, 0.16666667
    %v293 = vmul.f32 %v277, 0.16666667
    %v294 = vmul.f32 %v278, 0.16666667
    %v295 = vmul.f32 %v279, 0.16666667
    %v296 = vmul.f32 %v280, 0.16666667
    %v297 = vmul.f32 %v281, 0.16666667
    %v298 = vmul.f32 %v282, 0.16666667
    %299 = vst [vmem:[#allocation2] sm:$0xff] 0.0
    %300 = vst [vmem:[#allocation2 + $0x8] sm:$0x3] 0.0
    %301 = vst [vmem:[#allocation2 + $0xa0] sm:$0xff] 0.0
    %302 = vst [vmem:[#allocation2 + $0xa8] sm:$0x3] 0.0
    %s303 = scalar_lea.vmem [#allocation2], 144
    %304 = vst [vmem:[%s303] sm:$0xff] 0.0
    %305 = vst [vmem:[%s303 + $0x8] sm:$0x3] 0.0
    %306 = vst [vmem:[%s303 + $0xa0] sm:$0xff] 0.0
    %307 = vst [vmem:[%s303 + $0xa8] sm:$0x3] 0.0
    %308 = vst [vmem:[#allocation2] sm:$0x1] 0.0
    %309 = vst [vmem:[#allocation2 + $0x10] sm:$0x1] 0.0
    %310 = vst [vmem:[#allocation2 + $0x20] sm:$0x1] 0.0
    %311 = vst [vmem:[#allocation2 + $0x30] sm:$0x1] 0.0
    %312 = vst [vmem:[#allocation2 + $0x40] sm:$0x1] 0.0
    %313 = vst [vmem:[#allocation2 + $0x50] sm:$0x1] 0.0
    %314 = vst [vmem:[#allocation2 + $0x60] sm:$0x1] 0.0
    %315 = vst [vmem:[#allocation2 + $0x70] sm:$0x1] 0.0
    %316 = vst [vmem:[#allocation2 + $0x80] sm:$0x1] 0.0
    %317 = vst [vmem:[#allocation2 + $0x90] sm:$0x1] 0.0
    %318 = vst [vmem:[#allocation2 + $0xa0] sm:$0x1] 0.0
    %319 = vst [vmem:[#allocation2 + $0xb0] sm:$0x1] 0.0
    %320 = vst [vmem:[#allocation2 + $0xc0] sm:$0x1] 0.0
    %321 = vst [vmem:[#allocation2 + $0xd0] sm:$0x1] 0.0
    %322 = vst [vmem:[#allocation2 + $0xe0] sm:$0x1] 0.0
    %323 = vst [vmem:[#allocation2 + $0xf0] sm:$0x1] 0.0
    %324 = vst [vmem:[#allocation2 + $0x100] sm:$0x1] 0.0
    %325 = vst [vmem:[#allocation2 + $0x110] sm:$0x1] 0.0
    %326 = vst [vmem:[#allocation2 + $0x120] sm:$0x1] 0.0
    %327 = vst [vmem:[#allocation2 + $0x130] sm:$0x1] 0.0
    %328 = vst [vmem:[#allocation2 + $0x9] sm:$0x1] 0.0
    %329 = vst [vmem:[#allocation2 + $0x19] sm:$0x1] 0.0
    %330 = vst [vmem:[#allocation2 + $0x29] sm:$0x1] 0.0
    %331 = vst [vmem:[#allocation2 + $0x39] sm:$0x1] 0.0
    %332 = vst [vmem:[#allocation2 + $0x49] sm:$0x1] 0.0
    %333 = vst [vmem:[#allocation2 + $0x59] sm:$0x1] 0.0
    %334 = vst [vmem:[#allocation2 + $0x69] sm:$0x1] 0.0
    %335 = vst [vmem:[#allocation2 + $0x79] sm:$0x1] 0.0
    %336 = vst [vmem:[#allocation2 + $0x89] sm:$0x1] 0.0
    %337 = vst [vmem:[#allocation2 + $0x99] sm:$0x1] 0.0
    %338 = vst [vmem:[#allocation2 + $0xa9] sm:$0x1] 0.0
    %339 = vst [vmem:[#allocation2 + $0xb9] sm:$0x1] 0.0
    %340 = vst [vmem:[#allocation2 + $0xc9] sm:$0x1] 0.0
    %341 = vst [vmem:[#allocation2 + $0xd9] sm:$0x1] 0.0
    %342 = vst [vmem:[#allocation2 + $0xe9] sm:$0x1] 0.0
    %343 = vst [vmem:[#allocation2 + $0xf9] sm:$0x1] 0.0
    %344 = vst [vmem:[#allocation2 + $0x109] sm:$0x1] 0.0
    %345 = vst [vmem:[#allocation2 + $0x119] sm:$0x1] 0.0
    %346 = vst [vmem:[#allocation2 + $0x129] sm:$0x1] 0.0
    %347 = vst [vmem:[#allocation2 + $0x139] sm:$0x1] 0.0
    %s348 = scalar_lea.vmem [#allocation2], 16
    %349 = vst [vmem:[%s348 + $0x1] sm:$0xff] %v283
    %350 = vst [vmem:[%s348 + $0x11] sm:$0xff] %v284
    %351 = vst [vmem:[%s348 + $0x21] sm:$0xff] %v285
    %352 = vst [vmem:[%s348 + $0x31] sm:$0xff] %v286
    %353 = vst [vmem:[%s348 + $0x41] sm:$0xff] %v287
    %354 = vst [vmem:[%s348 + $0x51] sm:$0xff] %v288
    %355 = vst [vmem:[%s348 + $0x61] sm:$0xff] %v289
    %356 = vst [vmem:[%s348 + $0x71] sm:$0xff] %v290
    %357 = vst [vmem:[%s348 + $0xa1] sm:$0xff] %v291
    %358 = vst [vmem:[%s348 + $0xb1] sm:$0xff] %v292
    %359 = vst [vmem:[%s348 + $0xc1] sm:$0xff] %v293
    %360 = vst [vmem:[%s348 + $0xd1] sm:$0xff] %v294
    %361 = vst [vmem:[%s348 + $0xe1] sm:$0xff] %v295
    %362 = vst [vmem:[%s348 + $0xf1] sm:$0xff] %v296
    %363 = vst [vmem:[%s348 + $0x101] sm:$0xff] %v297
    %364 = vst [vmem:[%s348 + $0x111] sm:$0xff] %v298
    %v365 = vld [vmem:[%s3] sm:$0xff]
    %v366 = vld [vmem:[%s3 + $0x8] sm:$0x1]
    %v367 = vld [vmem:[#allocation2] sm:$0xff]
    %v368 = vld [vmem:[#allocation2 + $0x10] sm:$0xff]
    %v369 = vld [vmem:[#allocation2 + $0x20] sm:$0xff]
    %v370 = vld [vmem:[#allocation2 + $0x30] sm:$0xff]
    %v371 = vld [vmem:[#allocation2 + $0x40] sm:$0xff]
    %v372 = vld [vmem:[#allocation2 + $0x50] sm:$0xff]
    %v373 = vld [vmem:[#allocation2 + $0x60] sm:$0xff]
    %v374 = vld [vmem:[#allocation2 + $0x70] sm:$0xff]
    %v375 = vld [vmem:[#allocation2 + $0xa0] sm:$0xff]
    %v376 = vld [vmem:[#allocation2 + $0xb0] sm:$0xff]
    %v377 = vld [vmem:[#allocation2 + $0xc0] sm:$0xff]
    %v378 = vld [vmem:[#allocation2 + $0xd0] sm:$0xff]
    %v379 = vld [vmem:[#allocation2 + $0xe0] sm:$0xff]
    %v380 = vld [vmem:[#allocation2 + $0xf0] sm:$0xff]
    %v381 = vld [vmem:[#allocation2 + $0x100] sm:$0xff]
    %v382 = vld [vmem:[#allocation2 + $0x110] sm:$0xff]
    %v383 = vlaneseq
    %v384 = vshrl.u32 %v383, 7
    %v385 = vsub.s32 0, %v384
    %v386 = vrot.slane %v365, %v385
    %v387 = vmul.f32 %v367, %v386
    %v388 = vmul.f32 %v368, %v386
    %v389 = vmul.f32 %v369, %v386
    %v390 = vmul.f32 %v370, %v386
    %v391 = vmul.f32 %v371, %v386
    %v392 = vmul.f32 %v372, %v386
    %v393 = vmul.f32 %v373, %v386
    %v394 = vmul.f32 %v374, %v386
    %v395 = vmul.f32 %v375, %v386
    %v396 = vmul.f32 %v376, %v386
    %v397 = vmul.f32 %v377, %v386
    %v398 = vmul.f32 %v378, %v386
    %v399 = vmul.f32 %v379, %v386
    %v400 = vmul.f32 %v380, %v386
    %v401 = vmul.f32 %v381, %v386
    %v402 = vmul.f32 %v382, %v386
    %v403 = vadd.f32 %v387, 0.0
    %v404 = vadd.f32 %v388, 0.0
    %v405 = vadd.f32 %v389, 0.0
    %v406 = vadd.f32 %v390, 0.0
    %v407 = vadd.f32 %v391, 0.0
    %v408 = vadd.f32 %v392, 0.0
    %v409 = vadd.f32 %v393, 0.0
    %v410 = vadd.f32 %v394, 0.0
    %v411 = vadd.f32 %v395, 0.0
    %v412 = vadd.f32 %v396, 0.0
    %v413 = vadd.f32 %v397, 0.0
    %v414 = vadd.f32 %v398, 0.0
    %v415 = vadd.f32 %v399, 0.0
    %v416 = vadd.f32 %v400, 0.0
    %v417 = vadd.f32 %v401, 0.0
    %v418 = vadd.f32 %v402, 0.0
    %v419 = vld [vmem:[#allocation2 + $0x1] sm:$0xff]
    %v420 = vld [vmem:[#allocation2 + $0x11] sm:$0xff]
    %v421 = vld [vmem:[#allocation2 + $0x21] sm:$0xff]
    %v422 = vld [vmem:[#allocation2 + $0x31] sm:$0xff]
    %v423 = vld [vmem:[#allocation2 + $0x41] sm:$0xff]
    %v424 = vld [vmem:[#allocation2 + $0x51] sm:$0xff]
    %v425 = vld [vmem:[#allocation2 + $0x61] sm:$0xff]
    %v426 = vld [vmem:[#allocation2 + $0x71] sm:$0xff]
    %v427 = vld [vmem:[#allocation2 + $0xa1] sm:$0xff]
    %v428 = vld [vmem:[#allocation2 + $0xb1] sm:$0xff]
    %v429 = vld [vmem:[#allocation2 + $0xc1] sm:$0xff]
    %v430 = vld [vmem:[#allocation2 + $0xd1] sm:$0xff]
    %v431 = vld [vmem:[#allocation2 + $0xe1] sm:$0xff]
    %v432 = vld [vmem:[#allocation2 + $0xf1] sm:$0xff]
    %v433 = vld [vmem:[#allocation2 + $0x101] sm:$0xff]
    %v434 = vld [vmem:[#allocation2 + $0x111] sm:$0xff]
    %v435 = vlaneseq
    %v436 = vshrl.u32 %v435, 7
    %v437 = vsub.s32 1, %v436
    %v438 = vrot.slane %v365, %v437
    %v439 = vmul.f32 %v419, %v438
    %v440 = vmul.f32 %v420, %v438
    %v441 = vmul.f32 %v421, %v438
    %v442 = vmul.f32 %v422, %v438
    %v443 = vmul.f32 %v423, %v438
    %v444 = vmul.f32 %v424, %v438
    %v445 = vmul.f32 %v425, %v438
    %v446 = vmul.f32 %v426, %v438
    %v447 = vmul.f32 %v427, %v438
    %v448 = vmul.f32 %v428, %v438
    %v449 = vmul.f32 %v429, %v438
    %v450 = vmul.f32 %v430, %v438
    %v451 = vmul.f32 %v431, %v438
    %v452 = vmul.f32 %v432, %v438
    %v453 = vmul.f32 %v433, %v438
    %v454 = vmul.f32 %v434, %v438
    %v455 = vadd.f32 %v403, %v439
    %v456 = vadd.f32 %v404, %v440
    %v457 = vadd.f32 %v405, %v441
    %v458 = vadd.f32 %v406, %v442
    %v459 = vadd.f32 %v407, %v443
    %v460 = vadd.f32 %v408, %v444
    %v461 = vadd.f32 %v409, %v445
    %v462 = vadd.f32 %v410, %v446
    %v463 = vadd.f32 %v411, %v447
    %v464 = vadd.f32 %v412, %v448
    %v465 = vadd.f32 %v413, %v449
    %v466 = vadd.f32 %v414, %v450
    %v467 = vadd.f32 %v415, %v451
    %v468 = vadd.f32 %v416, %v452
    %v469 = vadd.f32 %v417, %v453
    %v470 = vadd.f32 %v418, %v454
    %v471 = vld [vmem:[#allocation2 + $0x2] sm:$0xff]
    %v472 = vld [vmem:[#allocation2 + $0x12] sm:$0xff]
    %v473 = vld [vmem:[#allocation2 + $0x22] sm:$0xff]
    %v474 = vld [vmem:[#allocation2 + $0x32] sm:$0xff]
    %v475 = vld [vmem:[#allocation2 + $0x42] sm:$0xff]
    %v476 = vld [vmem:[#allocation2 + $0x52] sm:$0xff]
    %v477 = vld [vmem:[#allocation2 + $0x62] sm:$0xff]
    %v478 = vld [vmem:[#allocation2 + $0x72] sm:$0xff]
    %v479 = vld [vmem:[#allocation2 + $0xa2] sm:$0xff]
    %v480 = vld [vmem:[#allocation2 + $0xb2] sm:$0xff]
    %v481 = vld [vmem:[#allocation2 + $0xc2] sm:$0xff]
    %v482 = vld [vmem:[#allocation2 + $0xd2] sm:$0xff]
    %v483 = vld [vmem:[#allocation2 + $0xe2] sm:$0xff]
    %v484 = vld [vmem:[#allocation2 + $0xf2] sm:$0xff]
    %v485 = vld [vmem:[#allocation2 + $0x102] sm:$0xff]
    %v486 = vld [vmem:[#allocation2 + $0x112] sm:$0xff]
    %v487 = vlaneseq
    %v488 = vshrl.u32 %v487, 7
    %v489 = vsub.s32 2, %v488
    %v490 = vrot.slane %v365, %v489
    %v491 = vmul.f32 %v471, %v490
    %v492 = vmul.f32 %v472, %v490
    %v493 = vmul.f32 %v473, %v490
    %v494 = vmul.f32 %v474, %v490
    %v495 = vmul.f32 %v475, %v490
    %v496 = vmul.f32 %v476, %v490
    %v497 = vmul.f32 %v477, %v490
    %v498 = vmul.f32 %v478, %v490
    %v499 = vmul.f32 %v479, %v490
    %v500 = vmul.f32 %v480, %v490
    %v501 = vmul.f32 %v481, %v490
    %v502 = vmul.f32 %v482, %v490
    %v503 = vmul.f32 %v483, %v490
    %v504 = vmul.f32 %v484, %v490
    %v505 = vmul.f32 %v485, %v490
    %v506 = vmul.f32 %v486, %v490
    %v507 = vadd.f32 %v455, %v491
    %v508 = vadd.f32 %v456, %v492
    %v509 = vadd.f32 %v457, %v493
    %v510 = vadd.f32 %v458, %v494
    %v511 = vadd.f32 %v459, %v495
    %v512 = vadd.f32 %v460, %v496
    %v513 = vadd.f32 %v461, %v497
    %v514 = vadd.f32 %v462, %v498
    %v515 = vadd.f32 %v463, %v499
    %v516 = vadd.f32 %v464, %v500
    %v517 = vadd.f32 %v465, %v501
    %v518 = vadd.f32 %v466, %v502
    %v519 = vadd.f32 %v467, %v503
    %v520 = vadd.f32 %v468, %v504
    %v521 = vadd.f32 %v469, %v505
    %v522 = vadd.f32 %v470, %v506
    %v523 = vld [vmem:[%s348] sm:$0xff]
    %v524 = vld [vmem:[%s348 + $0x10] sm:$0xff]
    %v525 = vld [vmem:[%s348 + $0x20] sm:$0xff]
    %v526 = vld [vmem:[%s348 + $0x30] sm:$0xff]
    %v527 = vld [vmem:[%s348 + $0x40] sm:$0xff]
    %v528 = vld [vmem:[%s348 + $0x50] sm:$0xff]
    %v529 = vld [vmem:[%s348 + $0x60] sm:$0xff]
    %v530 = vld [vmem:[%s348 + $0x70] sm:$0xff]
    %v531 = vld [vmem:[%s348 + $0xa0] sm:$0xff]
    %v532 = vld [vmem:[%s348 + $0xb0] sm:$0xff]
    %v533 = vld [vmem:[%s348 + $0xc0] sm:$0xff]
    %v534 = vld [vmem:[%s348 + $0xd0] sm:$0xff]
    %v535 = vld [vmem:[%s348 + $0xe0] sm:$0xff]
    %v536 = vld [vmem:[%s348 + $0xf0] sm:$0xff]
    %v537 = vld [vmem:[%s348 + $0x100] sm:$0xff]
    %v538 = vld [vmem:[%s348 + $0x110] sm:$0xff]
    %v539 = vlaneseq
    %v540 = vshrl.u32 %v539, 7
    %v541 = vsub.s32 3, %v540
    %v542 = vrot.slane %v365, %v541
    %v543 = vmul.f32 %v523, %v542
    %v544 = vmul.f32 %v524, %v542
    %v545 = vmul.f32 %v525, %v542
    %v546 = vmul.f32 %v526, %v542
    %v547 = vmul.f32 %v527, %v542
    %v548 = vmul.f32 %v528, %v542
    %v549 = vmul.f32 %v529, %v542
    %v550 = vmul.f32 %v530, %v542
    %v551 = vmul.f32 %v531, %v542
    %v552 = vmul.f32 %v532, %v542
    %v553 = vmul.f32 %v533, %v542
    %v554 = vmul.f32 %v534, %v542
    %v555 = vmul.f32 %v535, %v542
    %v556 = vmul.f32 %v536, %v542
    %v557 = vmul.f32 %v537, %v542
    %v558 = vmul.f32 %v538, %v542
    %v559 = vadd.f32 %v507, %v543
    %v560 = vadd.f32 %v508, %v544
    %v561 = vadd.f32 %v509, %v545
    %v562 = vadd.f32 %v510, %v546
    %v563 = vadd.f32 %v511, %v547
    %v564 = vadd.f32 %v512, %v548
    %v565 = vadd.f32 %v513, %v549
    %v566 = vadd.f32 %v514, %v550
    %v567 = vadd.f32 %v515, %v551
    %v568 = vadd.f32 %v516, %v552
    %v569 = vadd.f32 %v517, %v553
    %v570 = vadd.f32 %v518, %v554
    %v571 = vadd.f32 %v519, %v555
    %v572 = vadd.f32 %v520, %v556
    %v573 = vadd.f32 %v521, %v557
    %v574 = vadd.f32 %v522, %v558
    %v575 = vld [vmem:[%s348 + $0x1] sm:$0xff]
    %v576 = vld [vmem:[%s348 + $0x11] sm:$0xff]
    %v577 = vld [vmem:[%s348 + $0x21] sm:$0xff]
    %v578 = vld [vmem:[%s348 + $0x31] sm:$0xff]
    %v579 = vld [vmem:[%s348 + $0x41] sm:$0xff]
    %v580 = vld [vmem:[%s348 + $0x51] sm:$0xff]
    %v581 = vld [vmem:[%s348 + $0x61] sm:$0xff]
    %v582 = vld [vmem:[%s348 + $0x71] sm:$0xff]
    %v583 = vld [vmem:[%s348 + $0xa1] sm:$0xff]
    %v584 = vld [vmem:[%s348 + $0xb1] sm:$0xff]
    %v585 = vld [vmem:[%s348 + $0xc1] sm:$0xff]
    %v586 = vld [vmem:[%s348 + $0xd1] sm:$0xff]
    %v587 = vld [vmem:[%s348 + $0xe1] sm:$0xff]
    %v588 = vld [vmem:[%s348 + $0xf1] sm:$0xff]
    %v589 = vld [vmem:[%s348 + $0x101] sm:$0xff]
    %v590 = vld [vmem:[%s348 + $0x111] sm:$0xff]
    %v591 = vlaneseq
    %v592 = vshrl.u32 %v591, 7
    %v593 = vsub.s32 4, %v592
    %v594 = vrot.slane %v365, %v593
    %v595 = vmul.f32 %v575, %v594
    %v596 = vmul.f32 %v576, %v594
    %v597 = vmul.f32 %v577, %v594
    %v598 = vmul.f32 %v578, %v594
    %v599 = vmul.f32 %v579, %v594
    %v600 = vmul.f32 %v580, %v594
    %v601 = vmul.f32 %v581, %v594
    %v602 = vmul.f32 %v582, %v594
    %v603 = vmul.f32 %v583, %v594
    %v604 = vmul.f32 %v584, %v594
    %v605 = vmul.f32 %v585, %v594
    %v606 = vmul.f32 %v586, %v594
    %v607 = vmul.f32 %v587, %v594
    %v608 = vmul.f32 %v588, %v594
    %v609 = vmul.f32 %v589, %v594
    %v610 = vmul.f32 %v590, %v594
    %v611 = vadd.f32 %v559, %v595
    %v612 = vadd.f32 %v560, %v596
    %v613 = vadd.f32 %v561, %v597
    %v614 = vadd.f32 %v562, %v598
    %v615 = vadd.f32 %v563, %v599
    %v616 = vadd.f32 %v564, %v600
    %v617 = vadd.f32 %v565, %v601
    %v618 = vadd.f32 %v566, %v602
    %v619 = vadd.f32 %v567, %v603
    %v620 = vadd.f32 %v568, %v604
    %v621 = vadd.f32 %v569, %v605
    %v622 = vadd.f32 %v570, %v606
    %v623 = vadd.f32 %v571, %v607
    %v624 = vadd.f32 %v572, %v608
    %v625 = vadd.f32 %v573, %v609
    %v626 = vadd.f32 %v574, %v610
    %v627 = vld [vmem:[%s348 + $0x2] sm:$0xff]
    %v628 = vld [vmem:[%s348 + $0x12] sm:$0xff]
    %v629 = vld [vmem:[%s348 + $0x22] sm:$0xff]
    %v630 = vld [vmem:[%s348 + $0x32] sm:$0xff]
    %v631 = vld [vmem:[%s348 + $0x42] sm:$0xff]
    %v632 = vld [vmem:[%s348 + $0x52] sm:$0xff]
    %v633 = vld [vmem:[%s348 + $0x62] sm:$0xff]
    %v634 = vld [vmem:[%s348 + $0x72] sm:$0xff]
    %v635 = vld [vmem:[%s348 + $0xa2] sm:$0xff]
    %v636 = vld [vmem:[%s348 + $0xb2] sm:$0xff]
    %v637 = vld [vmem:[%s348 + $0xc2] sm:$0xff]
    %v638 = vld [vmem:[%s348 + $0xd2] sm:$0xff]
    %v639 = vld [vmem:[%s348 + $0xe2] sm:$0xff]
    %v640 = vld [vmem:[%s348 + $0xf2] sm:$0xff]
    %v641 = vld [vmem:[%s348 + $0x102] sm:$0xff]
    %v642 = vld [vmem:[%s348 + $0x112] sm:$0xff]
    %v643 = vlaneseq
    %v644 = vshrl.u32 %v643, 7
    %v645 = vsub.s32 5, %v644
    %v646 = vrot.slane %v365, %v645
    %v647 = vmul.f32 %v627, %v646
    %v648 = vmul.f32 %v628, %v646
    %v649 = vmul.f32 %v629, %v646
    %v650 = vmul.f32 %v630, %v646
    %v651 = vmul.f32 %v631, %v646
    %v652 = vmul.f32 %v632, %v646
    %v653 = vmul.f32 %v633, %v646
    %v654 = vmul.f32 %v634, %v646
    %v655 = vmul.f32 %v635, %v646
    %v656 = vmul.f32 %v636, %v646
    %v657 = vmul.f32 %v637, %v646
    %v658 = vmul.f32 %v638, %v646
    %v659 = vmul.f32 %v639, %v646
    %v660 = vmul.f32 %v640, %v646
    %v661 = vmul.f32 %v641, %v646
    %v662 = vmul.f32 %v642, %v646
    %v663 = vadd.f32 %v611, %v647
    %v664 = vadd.f32 %v612, %v648
    %v665 = vadd.f32 %v613, %v649
    %v666 = vadd.f32 %v614, %v650
    %v667 = vadd.f32 %v615, %v651
    %v668 = vadd.f32 %v616, %v652
    %v669 = vadd.f32 %v617, %v653
    %v670 = vadd.f32 %v618, %v654
    %v671 = vadd.f32 %v619, %v655
    %v672 = vadd.f32 %v620, %v656
    %v673 = vadd.f32 %v621, %v657
    %v674 = vadd.f32 %v622, %v658
    %v675 = vadd.f32 %v623, %v659
    %v676 = vadd.f32 %v624, %v660
    %v677 = vadd.f32 %v625, %v661
    %v678 = vadd.f32 %v626, %v662
    %s679 = scalar_lea.vmem [#allocation2], 32
    %v680 = vld [vmem:[%s679] sm:$0xff]
    %v681 = vld [vmem:[%s679 + $0x10] sm:$0xff]
    %v682 = vld [vmem:[%s679 + $0x20] sm:$0xff]
    %v683 = vld [vmem:[%s679 + $0x30] sm:$0xff]
    %v684 = vld [vmem:[%s679 + $0x40] sm:$0xff]
    %v685 = vld [vmem:[%s679 + $0x50] sm:$0xff]
    %v686 = vld [vmem:[%s679 + $0x60] sm:$0xff]
    %v687 = vld [vmem:[%s679 + $0x70] sm:$0xff]
    %v688 = vld [vmem:[%s679 + $0xa0] sm:$0xff]
    %v689 = vld [vmem:[%s679 + $0xb0] sm:$0xff]
    %v690 = vld [vmem:[%s679 + $0xc0] sm:$0xff]
    %v691 = vld [vmem:[%s679 + $0xd0] sm:$0xff]
    %v692 = vld [vmem:[%s679 + $0xe0] sm:$0xff]
    %v693 = vld [vmem:[%s679 + $0xf0] sm:$0xff]
    %v694 = vld [vmem:[%s679 + $0x100] sm:$0xff]
    %v695 = vld [vmem:[%s679 + $0x110] sm:$0xff]
    %v696 = vlaneseq
    %v697 = vshrl.u32 %v696, 7
    %v698 = vsub.s32 6, %v697
    %v699 = vrot.slane %v365, %v698
    %v700 = vmul.f32 %v680, %v699
    %v701 = vmul.f32 %v681, %v699
    %v702 = vmul.f32 %v682, %v699
    %v703 = vmul.f32 %v683, %v699
    %v704 = vmul.f32 %v684, %v699
    %v705 = vmul.f32 %v685, %v699
    %v706 = vmul.f32 %v686, %v699
    %v707 = vmul.f32 %v687, %v699
    %v708 = vmul.f32 %v688, %v699
    %v709 = vmul.f32 %v689, %v699
    %v710 = vmul.f32 %v690, %v699
    %v711 = vmul.f32 %v691, %v699
    %v712 = vmul.f32 %v692, %v699
    %v713 = vmul.f32 %v693, %v699
    %v714 = vmul.f32 %v694, %v699
    %v715 = vmul.f32 %v695, %v699
    %v716 = vadd.f32 %v663, %v700
    %v717 = vadd.f32 %v664, %v701
    %v718 = vadd.f32 %v665, %v702
    %v719 = vadd.f32 %v666, %v703
    %v720 = vadd.f32 %v667, %v704
    %v721 = vadd.f32 %v668, %v705
    %v722 = vadd.f32 %v669, %v706
    %v723 = vadd.f32 %v670, %v707
    %v724 = vadd.f32 %v671, %v708
    %v725 = vadd.f32 %v672, %v709
    %v726 = vadd.f32 %v673, %v710
    %v727 = vadd.f32 %v674, %v711
    %v728 = vadd.f32 %v675, %v712
    %v729 = vadd.f32 %v676, %v713
    %v730 = vadd.f32 %v677, %v714
    %v731 = vadd.f32 %v678, %v715
    %v732 = vld [vmem:[%s679 + $0x1] sm:$0xff]
    %v733 = vld [vmem:[%s679 + $0x11] sm:$0xff]
    %v734 = vld [vmem:[%s679 + $0x21] sm:$0xff]
    %v735 = vld [vmem:[%s679 + $0x31] sm:$0xff]
    %v736 = vld [vmem:[%s679 + $0x41] sm:$0xff]
    %v737 = vld [vmem:[%s679 + $0x51] sm:$0xff]
    %v738 = vld [vmem:[%s679 + $0x61] sm:$0xff]
    %v739 = vld [vmem:[%s679 + $0x71] sm:$0xff]
    %v740 = vld [vmem:[%s679 + $0xa1] sm:$0xff]
    %v741 = vld [vmem:[%s679 + $0xb1] sm:$0xff]
    %v742 = vld [vmem:[%s679 + $0xc1] sm:$0xff]
    %v743 = vld [vmem:[%s679 + $0xd1] sm:$0xff]
    %v744 = vld [vmem:[%s679 + $0xe1] sm:$0xff]
    %v745 = vld [vmem:[%s679 + $0xf1] sm:$0xff]
    %v746 = vld [vmem:[%s679 + $0x101] sm:$0xff]
    %v747 = vld [vmem:[%s679 + $0x111] sm:$0xff]
    %v748 = vlaneseq
    %v749 = vshrl.u32 %v748, 7
    %v750 = vsub.s32 7, %v749
    %v751 = vrot.slane %v365, %v750
    %v752 = vmul.f32 %v732, %v751
    %v753 = vmul.f32 %v733, %v751
    %v754 = vmul.f32 %v734, %v751
    %v755 = vmul.f32 %v735, %v751
    %v756 = vmul.f32 %v736, %v751
    %v757 = vmul.f32 %v737, %v751
    %v758 = vmul.f32 %v738, %v751
    %v759 = vmul.f32 %v739, %v751
    %v760 = vmul.f32 %v740, %v751
    %v761 = vmul.f32 %v741, %v751
    %v762 = vmul.f32 %v742, %v751
    %v763 = vmul.f32 %v743, %v751
    %v764 = vmul.f32 %v744, %v751
    %v765 = vmul.f32 %v745, %v751
    %v766 = vmul.f32 %v746, %v751
    %v767 = vmul.f32 %v747, %v751
    %v768 = vadd.f32 %v716, %v752
    %v769 = vadd.f32 %v717, %v753
    %v770 = vadd.f32 %v718, %v754
    %v771 = vadd.f32 %v719, %v755
    %v772 = vadd.f32 %v720, %v756
    %v773 = vadd.f32 %v721, %v757
    %v774 = vadd.f32 %v722, %v758
    %v775 = vadd.f32 %v723, %v759
    %v776 = vadd.f32 %v724, %v760
    %v777 = vadd.f32 %v725, %v761
    %v778 = vadd.f32 %v726, %v762
    %v779 = vadd.f32 %v727, %v763
    %v780 = vadd.f32 %v728, %v764
    %v781 = vadd.f32 %v729, %v765
    %v782 = vadd.f32 %v730, %v766
    %v783 = vadd.f32 %v731, %v767
    %v784 = vld [vmem:[%s679 + $0x2] sm:$0xff]
    %v785 = vld [vmem:[%s679 + $0x12] sm:$0xff]
    %v786 = vld [vmem:[%s679 + $0x22] sm:$0xff]
    %v787 = vld [vmem:[%s679 + $0x32] sm:$0xff]
    %v788 = vld [vmem:[%s679 + $0x42] sm:$0xff]
    %v789 = vld [vmem:[%s679 + $0x52] sm:$0xff]
    %v790 = vld [vmem:[%s679 + $0x62] sm:$0xff]
    %v791 = vld [vmem:[%s679 + $0x72] sm:$0xff]
    %v792 = vld [vmem:[%s679 + $0xa2] sm:$0xff]
    %v793 = vld [vmem:[%s679 + $0xb2] sm:$0xff]
    %v794 = vld [vmem:[%s679 + $0xc2] sm:$0xff]
    %v795 = vld [vmem:[%s679 + $0xd2] sm:$0xff]
    %v796 = vld [vmem:[%s679 + $0xe2] sm:$0xff]
    %v797 = vld [vmem:[%s679 + $0xf2] sm:$0xff]
    %v798 = vld [vmem:[%s679 + $0x102] sm:$0xff]
    %v799 = vld [vmem:[%s679 + $0x112] sm:$0xff]
    %v800 = vlaneseq
    %v801 = vshrl.u32 %v800, 7
    %v802 = vsub.s32 0, %v801
    %v803 = vrot.slane %v366, %v802
    %v804 = vmul.f32 %v784, %v803
    %v805 = vmul.f32 %v785, %v803
    %v806 = vmul.f32 %v786, %v803
    %v807 = vmul.f32 %v787, %v803
    %v808 = vmul.f32 %v788, %v803
    %v809 = vmul.f32 %v789, %v803
    %v810 = vmul.f32 %v790, %v803
    %v811 = vmul.f32 %v791, %v803
    %v812 = vmul.f32 %v792, %v803
    %v813 = vmul.f32 %v793, %v803
    %v814 = vmul.f32 %v794, %v803
    %v815 = vmul.f32 %v795, %v803
    %v816 = vmul.f32 %v796, %v803
    %v817 = vmul.f32 %v797, %v803
    %v818 = vmul.f32 %v798, %v803
    %v819 = vmul.f32 %v799, %v803
    %v820 = vadd.f32 %v768, %v804
    %v821 = vadd.f32 %v769, %v805
    %v822 = vadd.f32 %v770, %v806
    %v823 = vadd.f32 %v771, %v807
    %v824 = vadd.f32 %v772, %v808
    %v825 = vadd.f32 %v773, %v809
    %v826 = vadd.f32 %v774, %v810
    %v827 = vadd.f32 %v775, %v811
    %v828 = vadd.f32 %v776, %v812
    %v829 = vadd.f32 %v777, %v813
    %v830 = vadd.f32 %v778, %v814
    %v831 = vadd.f32 %v779, %v815
    %v832 = vadd.f32 %v780, %v816
    %v833 = vadd.f32 %v781, %v817
    %v834 = vadd.f32 %v782, %v818
    %v835 = vadd.f32 %v783, %v819
    %v836 = vld [vmem:[%s4] sm:$0x1]
    %v838 = vlaneseq
    %v839 = vshrl.u32 %v838, 7
    %v840 = vsub.s32 0, %v839
    %v841 = vrot.slane %v836, %v840
    %v843 = vadd.f32 %v820, %v841
    %v844 = vadd.f32 %v821, %v841
    %v845 = vadd.f32 %v822, %v841
    %v846 = vadd.f32 %v823, %v841
    %v847 = vadd.f32 %v824, %v841
    %v848 = vadd.f32 %v825, %v841
    %v849 = vadd.f32 %v826, %v841
    %v850 = vadd.f32 %v827, %v841
    %v851 = vadd.f32 %v828, %v841
    %v852 = vadd.f32 %v829, %v841
    %v853 = vadd.f32 %v830, %v841
    %v854 = vadd.f32 %v831, %v841
    %v855 = vadd.f32 %v832, %v841
    %v856 = vadd.f32 %v833, %v841
    %v857 = vadd.f32 %v834, %v841
    %v858 = vadd.f32 %v835, %v841
    %v859 = vpack.c.bf16 %v844, %v843
    %v860 = vpack.c.bf16 %v846, %v845
    %v861 = vpack.c.bf16 %v848, %v847
    %v862 = vpack.c.bf16 %v850, %v849
    %v863 = vpack.c.bf16 %v852, %v851
    %v864 = vpack.c.bf16 %v854, %v853
    %v865 = vpack.c.bf16 %v856, %v855
    %v866 = vpack.c.bf16 %v858, %v857
    %v867 = vld [vmem:[%s5] sm:$0xf]
    %v868 = vld [vmem:[%s5 + $0x4] sm:$0xf]
    %v869 = vld [vmem:[%s5 + $0x8] sm:$0xf]
    %v870 = vld [vmem:[%s5 + $0xc] sm:$0xf]
    %v871 = vld [vmem:[%s5 + $0x10] sm:$0xf]
    %v872 = vld [vmem:[%s5 + $0x14] sm:$0xf]
    %v873 = vld [vmem:[%s5 + $0x18] sm:$0xf]
    %v874 = vld [vmem:[%s5 + $0x1c] sm:$0xf]
    %v875 = vld [vmem:[%s5 + $0x20] sm:$0xf]
    %v876 = vld [vmem:[%s5 + $0x24] sm:$0xf]
    %v877 = vld [vmem:[%s5 + $0x28] sm:$0xf]
    %v878 = vld [vmem:[%s5 + $0x2c] sm:$0xf]
    %v879 = vld [vmem:[%s5 + $0x30] sm:$0xf]
    %v880 = vld [vmem:[%s5 + $0x34] sm:$0xf]
    %v881 = vld [vmem:[%s5 + $0x38] sm:$0xf]
    %v882 = vld [vmem:[%s5 + $0x3c] sm:$0xf]
    %v883 = vld [vmem:[%s6] sm:$0x1]
    %v885 = vlaneseq
    %v886 = vshrl.u32 %v885, 7
    %v887 = vsub.s32 0, %v886
    %v888 = vrot.slane %v883, %v887
    %v906 = vunpack.c.l.b16 %v867
    %v907 = vunpack.c.l.b16 %v868
    %v908 = vunpack.c.l.b16 %v869
    %v909 = vunpack.c.l.b16 %v870
    %v910 = vunpack.c.l.b16 %v871
    %v911 = vunpack.c.l.b16 %v872
    %v912 = vunpack.c.l.b16 %v873
    %v913 = vunpack.c.l.b16 %v874
    %v914 = vunpack.c.l.b16 %v875
    %v915 = vunpack.c.l.b16 %v876
    %v916 = vunpack.c.l.b16 %v877
    %v917 = vunpack.c.l.b16 %v878
    %v918 = vunpack.c.l.b16 %v879
    %v919 = vunpack.c.l.b16 %v880
    %v920 = vunpack.c.l.b16 %v881
    %v921 = vunpack.c.l.b16 %v882
    %v922 = vpack.c.b16 %v907, %v906
    %v923 = vpack.c.b16 %v909, %v908
    %v924 = vpack.c.b16 %v911, %v910
    %v925 = vpack.c.b16 %v913, %v912
    %v926 = vpack.c.b16 %v915, %v914
    %v927 = vpack.c.b16 %v917, %v916
    %v928 = vpack.c.b16 %v919, %v918
    %v929 = vpack.c.b16 %v921, %v920
    %938 = vmatprep.subr.bf16.mxu0 0
    %939 = vmatpush1.bf16.msra.mxu0 %v922
    %940 = vmatprep.subr.bf16.mxu0 0
    %941 = vmatpush1.bf16.msra.mxu0 %v923
    %942 = vmatprep.subr.bf16.mxu0 0
    %943 = vmatpush1.bf16.msra.mxu0 %v924
    %944 = vmatprep.subr.bf16.mxu0 0
    %945 = vmatpush1.bf16.msra.mxu0 %v925
    %946 = vmatprep.subr.bf16.mxu0 0
    %947 = vmatpush1.bf16.msra.mxu0 %v926
    %948 = vmatprep.subr.bf16.mxu0 0
    %949 = vmatpush1.bf16.msra.mxu0 %v927
    %950 = vmatprep.subr.bf16.mxu0 0
    %951 = vmatpush1.bf16.msra.mxu0 %v928
    %952 = vmatprep.subr.bf16.mxu0 0
    %953 = vmatpush1.bf16.msra.mxu0 %v929
    %954 = vmatprep.subr.bf16.mxu0 0
    %955 = vmatpush1.bf16.msra.mxu0 0
    %956 = vmatprep.subr.bf16.mxu0 0
    %957 = vmatpush1.bf16.msra.mxu0 0
    %958 = vmatprep.subr.bf16.mxu0 0
    %959 = vmatpush1.bf16.msra.mxu0 0
    %960 = vmatprep.subr.bf16.mxu0 0
    %961 = vmatpush1.bf16.msra.mxu0 0
    %962 = vmatprep.subr.bf16.mxu0 0
    %963 = vmatpush1.bf16.msra.mxu0 0
    %964 = vmatprep.subr.bf16.mxu0 0
    %965 = vmatpush1.bf16.msra.mxu0 0
    %966 = vmatprep.subr.bf16.mxu0 0
    %967 = vmatpush1.bf16.msra.mxu0 0
    %968 = vmatprep.subr.bf16.mxu0 0
    %969 = vmatpush1.bf16.msra.mxu0 0
    %970 = vmatprep.mubr.bf16.mxu0 0
    %971 = vmatmul.mubr.bf16.gmra.mrb[0].mxu0 %v859
    %v972 = vpop.f32.mrb[0].mxu0
    %v973 = vadd.f32 %v888, %v972
    %v974 = vpop.f32.mrb[0].mxu0
    %v975 = vpop.f32.mrb[0].mxu0
    %v976 = vadd.f32 %v888, %v975
    %v977 = vpop.f32.mrb[0].mxu0
    %978 = vmatprep.mubr.bf16.mxu0 0
    %979 = vmatmul.mubr.bf16.gmra.mrb[0].mxu0 %v860
    %v980 = vpop.f32.mrb[0].mxu0
    %v981 = vadd.f32 %v888, %v980
    %v982 = vpop.f32.mrb[0].mxu0
    %v983 = vpop.f32.mrb[0].mxu0
    %v984 = vadd.f32 %v888, %v983
    %v985 = vpop.f32.mrb[0].mxu0
    %986 = vmatprep.mubr.bf16.mxu0 0
    %987 = vmatmul.mubr.bf16.gmra.mrb[0].mxu0 %v861
    %v988 = vpop.f32.mrb[0].mxu0
    %v989 = vadd.f32 %v888, %v988
    %v990 = vpop.f32.mrb[0].mxu0
    %v991 = vpop.f32.mrb[0].mxu0
    %v992 = vadd.f32 %v888, %v991
    %v993 = vpop.f32.mrb[0].mxu0
    %994 = vmatprep.mubr.bf16.mxu0 0
    %995 = vmatmul.mubr.bf16.gmra.mrb[0].mxu0 %v862
    %v996 = vpop.f32.mrb[0].mxu0
    %v997 = vadd.f32 %v888, %v996
    %v998 = vpop.f32.mrb[0].mxu0
    %v999 = vpop.f32.mrb[0].mxu0
    %v1000 = vadd.f32 %v888, %v999
    %v1001 = vpop.f32.mrb[0].mxu0
    %1002 = vmatprep.mubr.bf16.mxu0 0
    %1003 = vmatmul.mubr.bf16.gmra.mrb[0].mxu0 %v863
    %v1004 = vpop.f32.mrb[0].mxu0
    %v1005 = vadd.f32 %v888, %v1004
    %v1006 = vpop.f32.mrb[0].mxu0
    %v1007 = vpop.f32.mrb[0].mxu0
    %v1008 = vadd.f32 %v888, %v1007
    %v1009 = vpop.f32.mrb[0].mxu0
    %1010 = vmatprep.mubr.bf16.mxu0 0
    %1011 = vmatmul.mubr.bf16.gmra.mrb[0].mxu0 %v864
    %v1012 = vpop.f32.mrb[0].mxu0
    %v1013 = vadd.f32 %v888, %v1012
    %v1014 = vpop.f32.mrb[0].mxu0
    %v1015 = vpop.f32.mrb[0].mxu0
    %v1016 = vadd.f32 %v888, %v1015
    %v1017 = vpop.f32.mrb[0].mxu0
    %1018 = vmatprep.mubr.bf16.mxu0 0
    %1019 = vmatmul.mubr.bf16.gmra.mrb[0].mxu0 %v865
    %v1020 = vpop.f32.mrb[0].mxu0
    %v1021 = vadd.f32 %v888, %v1020
    %v1022 = vpop.f32.mrb[0].mxu0
    %v1023 = vpop.f32.mrb[0].mxu0
    %v1024 = vadd.f32 %v888, %v1023
    %v1025 = vpop.f32.mrb[0].mxu0
    %1026 = vmatprep.mubr.bf16.mxu0 0
    %1027 = vmatmul.mubr.bf16.gmra.mrb[0].mxu0 %v866
    %v1028 = vpop.f32.mrb[0].mxu0
    %v1029 = vadd.f32 %v888, %v1028
    %v1030 = vpop.f32.mrb[0].mxu0
    %v1031 = vpop.f32.mrb[0].mxu0
    %v1032 = vadd.f32 %v888, %v1031
    %v1033 = vpop.f32.mrb[0].mxu0
    %1034 = vdwg.mxu0
    %v1035 = vadd.f32 %v973, 3.0
    %v1036 = vadd.f32 %v976, 3.0
    %v1037 = vadd.f32 %v981, 3.0
    %v1038 = vadd.f32 %v984, 3.0
    %v1039 = vadd.f32 %v989, 3.0
    %v1040 = vadd.f32 %v992, 3.0
    %v1041 = vadd.f32 %v997, 3.0
    %v1042 = vadd.f32 %v1000, 3.0
    %v1043 = vadd.f32 %v1005, 3.0
    %v1044 = vadd.f32 %v1008, 3.0
    %v1045 = vadd.f32 %v1013, 3.0
    %v1046 = vadd.f32 %v1016, 3.0
    %v1047 = vadd.f32 %v1021, 3.0
    %v1048 = vadd.f32 %v1024, 3.0
    %v1049 = vadd.f32 %v1029, 3.0
    %v1050 = vadd.f32 %v1032, 3.0
    %v1051 = vmax.f32 %v1035, 0.0
    %v1052 = vmax.f32 %v1036, 0.0
    %v1053 = vmax.f32 %v1037, 0.0
    %v1054 = vmax.f32 %v1038, 0.0
    %v1055 = vmax.f32 %v1039, 0.0
    %v1056 = vmax.f32 %v1040, 0.0
    %v1057 = vmax.f32 %v1041, 0.0
    %v1058 = vmax.f32 %v1042, 0.0
    %v1059 = vmax.f32 %v1043, 0.0
    %v1060 = vmax.f32 %v1044, 0.0
    %v1061 = vmax.f32 %v1045, 0.0
    %v1062 = vmax.f32 %v1046, 0.0
    %v1063 = vmax.f32 %v1047, 0.0
    %v1064 = vmax.f32 %v1048, 0.0
    %v1065 = vmax.f32 %v1049, 0.0
    %v1066 = vmax.f32 %v1050, 0.0
    %v1067 = vmin.f32 %v1051, 6.0
    %v1068 = vmin.f32 %v1052, 6.0
    %v1069 = vmin.f32 %v1053, 6.0
    %v1070 = vmin.f32 %v1054, 6.0
    %v1071 = vmin.f32 %v1055, 6.0
    %v1072 = vmin.f32 %v1056, 6.0
    %v1073 = vmin.f32 %v1057, 6.0
    %v1074 = vmin.f32 %v1058, 6.0
    %v1075 = vmin.f32 %v1059, 6.0
    %v1076 = vmin.f32 %v1060, 6.0
    %v1077 = vmin.f32 %v1061, 6.0
    %v1078 = vmin.f32 %v1062, 6.0
    %v1079 = vmin.f32 %v1063, 6.0
    %v1080 = vmin.f32 %v1064, 6.0
    %v1081 = vmin.f32 %v1065, 6.0
    %v1082 = vmin.f32 %v1066, 6.0
    %v1083 = vmul.f32 %v973, %v1067
    %v1084 = vmul.f32 %v976, %v1068
    %v1085 = vmul.f32 %v981, %v1069
    %v1086 = vmul.f32 %v984, %v1070
    %v1087 = vmul.f32 %v989, %v1071
    %v1088 = vmul.f32 %v992, %v1072
    %v1089 = vmul.f32 %v997, %v1073
    %v1090 = vmul.f32 %v1000, %v1074
    %v1091 = vmul.f32 %v1005, %v1075
    %v1092 = vmul.f32 %v1008, %v1076
    %v1093 = vmul.f32 %v1013, %v1077
    %v1094 = vmul.f32 %v1016, %v1078
    %v1095 = vmul.f32 %v1021, %v1079
    %v1096 = vmul.f32 %v1024, %v1080
    %v1097 = vmul.f32 %v1029, %v1081
    %v1098 = vmul.f32 %v1032, %v1082
    %v1099 = vmul.f32 %v1083, 0.16666667
    %v1100 = vmul.f32 %v1084, 0.16666667
    %v1101 = vmul.f32 %v1085, 0.16666667
    %v1102 = vmul.f32 %v1086, 0.16666667
    %v1103 = vmul.f32 %v1087, 0.16666667
    %v1104 = vmul.f32 %v1088, 0.16666667
    %v1105 = vmul.f32 %v1089, 0.16666667
    %v1106 = vmul.f32 %v1090, 0.16666667
    %v1107 = vmul.f32 %v1091, 0.16666667
    %v1108 = vmul.f32 %v1092, 0.16666667
    %v1109 = vmul.f32 %v1093, 0.16666667
    %v1110 = vmul.f32 %v1094, 0.16666667
    %v1111 = vmul.f32 %v1095, 0.16666667
    %v1112 = vmul.f32 %v1096, 0.16666667
    %v1113 = vmul.f32 %v1097, 0.16666667
    %v1114 = vmul.f32 %v1098, 0.16666667
    %v1115 = vpack.c.bf16 %v1100, %v1099
    %v1116 = vpack.c.bf16 %v1102, %v1101
    %v1117 = vpack.c.bf16 %v1104, %v1103
    %v1118 = vpack.c.bf16 %v1106, %v1105
    %v1119 = vpack.c.bf16 %v1108, %v1107
    %v1120 = vpack.c.bf16 %v1110, %v1109
    %v1121 = vpack.c.bf16 %v1112, %v1111
    %v1122 = vpack.c.bf16 %v1114, %v1113
    %v1123 = vld [vmem:[%s7] sm:$0xf]
    %v1124 = vld [vmem:[%s7 + $0x4] sm:$0xf]
    %v1125 = vld [vmem:[%s7 + $0x8] sm:$0xf]
    %v1126 = vld [vmem:[%s7 + $0xc] sm:$0xf]
    %v1127 = vld [vmem:[%s7 + $0x10] sm:$0xf]
    %v1128 = vld [vmem:[%s7 + $0x14] sm:$0xf]
    %v1129 = vld [vmem:[%s7 + $0x18] sm:$0xf]
    %v1130 = vld [vmem:[%s7 + $0x1c] sm:$0xf]
    %v1131 = vld [vmem:[%s7 + $0x20] sm:$0xf]
    %v1132 = vld [vmem:[%s7 + $0x24] sm:$0xf]
    %v1133 = vld [vmem:[%s7 + $0x28] sm:$0xf]
    %v1134 = vld [vmem:[%s7 + $0x2c] sm:$0xf]
    %v1135 = vld [vmem:[%s7 + $0x30] sm:$0xf]
    %v1136 = vld [vmem:[%s7 + $0x34] sm:$0xf]
    %v1137 = vld [vmem:[%s7 + $0x38] sm:$0xf]
    %v1138 = vld [vmem:[%s7 + $0x3c] sm:$0xf]
    %v1139 = vld [vmem:[%s8] sm:$0x1]
    %v1141 = vlaneseq
    %v1142 = vshrl.u32 %v1141, 7
    %v1143 = vsub.s32 0, %v1142
    %v1144 = vrot.slane %v1139, %v1143
    %v1162 = vunpack.c.l.b16 %v1123
    %v1163 = vunpack.c.l.b16 %v1124
    %v1164 = vunpack.c.l.b16 %v1125
    %v1165 = vunpack.c.l.b16 %v1126
    %v1166 = vunpack.c.l.b16 %v1127
    %v1167 = vunpack.c.l.b16 %v1128
    %v1168 = vunpack.c.l.b16 %v1129
    %v1169 = vunpack.c.l.b16 %v1130
    %v1170 = vunpack.c.l.b16 %v1131
    %v1171 = vunpack.c.l.b16 %v1132
    %v1172 = vunpack.c.l.b16 %v1133
    %v1173 = vunpack.c.l.b16 %v1134
    %v1174 = vunpack.c.l.b16 %v1135
    %v1175 = vunpack.c.l.b16 %v1136
    %v1176 = vunpack.c.l.b16 %v1137
    %v1177 = vunpack.c.l.b16 %v1138
    %v1178 = vpack.c.b16 %v1163, %v1162
    %v1179 = vpack.c.b16 %v1165, %v1164
    %v1180 = vpack.c.b16 %v1167, %v1166
    %v1181 = vpack.c.b16 %v1169, %v1168
    %v1182 = vpack.c.b16 %v1171, %v1170
    %v1183 = vpack.c.b16 %v1173, %v1172
    %v1184 = vpack.c.b16 %v1175, %v1174
    %v1185 = vpack.c.b16 %v1177, %v1176
    %1194 = vmatprep.subr.bf16.mxu0 0
    %1195 = vmatpush1.bf16.msra.mxu0 %v1178
    %1196 = vmatprep.subr.bf16.mxu0 0
    %1197 = vmatpush1.bf16.msra.mxu0 %v1179
    %1198 = vmatprep.subr.bf16.mxu0 0
    %1199 = vmatpush1.bf16.msra.mxu0 %v1180
    %1200 = vmatprep.subr.bf16.mxu0 0
    %1201 = vmatpush1.bf16.msra.mxu0 %v1181
    %1202 = vmatprep.subr.bf16.mxu0 0
    %1203 = vmatpush1.bf16.msra.mxu0 %v1182
    %1204 = vmatprep.subr.bf16.mxu0 0
    %1205 = vmatpush1.bf16.msra.mxu0 %v1183
    %1206 = vmatprep.subr.bf16.mxu0 0
    %1207 = vmatpush1.bf16.msra.mxu0 %v1184
    %1208 = vmatprep.subr.bf16.mxu0 0
    %1209 = vmatpush1.bf16.msra.mxu0 %v1185
    %1210 = vmatprep.subr.bf16.mxu0 0
    %1211 = vmatpush1.bf16.msra.mxu0 0
    %1212 = vmatprep.subr.bf16.mxu0 0
    %1213 = vmatpush1.bf16.msra.mxu0 0
    %1214 = vmatprep.subr.bf16.mxu0 0
    %1215 = vmatpush1.bf16.msra.mxu0 0
    %1216 = vmatprep.subr.bf16.mxu0 0
    %1217 = vmatpush1.bf16.msra.mxu0 0
    %1218 = vmatprep.subr.bf16.mxu0 0
    %1219 = vmatpush1.bf16.msra.mxu0 0
    %1220 = vmatprep.subr.bf16.mxu0 0
    %1221 = vmatpush1.bf16.msra.mxu0 0
    %1222 = vmatprep.subr.bf16.mxu0 0
    %1223 = vmatpush1.bf16.msra.mxu0 0
    %1224 = vmatprep.subr.bf16.mxu0 0
    %1225 = vmatpush1.bf16.msra.mxu0 0
    %1226 = vmatprep.mubr.bf16.mxu0 0
    %1227 = vmatmul.mubr.bf16.gmra.mrb[0].mxu0 %v1115
    %v1228 = vpop.f32.mrb[0].mxu0
    %v1229 = vadd.f32 %v1144, %v1228
    %v1230 = vpop.f32.mrb[0].mxu0
    %v1231 = vpop.f32.mrb[0].mxu0
    %v1232 = vadd.f32 %v1144, %v1231
    %v1233 = vpop.f32.mrb[0].mxu0
    %1234 = vmatprep.mubr.bf16.mxu0 0
    %1235 = vmatmul.mubr.bf16.gmra.mrb[0].mxu0 %v1116
    %v1236 = vpop.f32.mrb[0].mxu0
    %v1237 = vadd.f32 %v1144, %v1236
    %v1238 = vpop.f32.mrb[0].mxu0
    %v1239 = vpop.f32.mrb[0].mxu0
    %v1240 = vadd.f32 %v1144, %v1239
    %v1241 = vpop.f32.mrb[0].mxu0
    %1242 = vmatprep.mubr.bf16.mxu0 0
    %1243 = vmatmul.mubr.bf16.gmra.mrb[0].mxu0 %v1117
    %v1244 = vpop.f32.mrb[0].mxu0
    %v1245 = vadd.f32 %v1144, %v1244
    %v1246 = vpop.f32.mrb[0].mxu0
    %v1247 = vpop.f32.mrb[0].mxu0
    %v1248 = vadd.f32 %v1144, %v1247
    %v1249 = vpop.f32.mrb[0].mxu0
    %1250 = vmatprep.mubr.bf16.mxu0 0
    %1251 = vmatmul.mubr.bf16.gmra.mrb[0].mxu0 %v1118
    %v1252 = vpop.f32.mrb[0].mxu0
    %v1253 = vadd.f32 %v1144, %v1252
    %v1254 = vpop.f32.mrb[0].mxu0
    %v1255 = vpop.f32.mrb[0].mxu0
    %v1256 = vadd.f32 %v1144, %v1255
    %v1257 = vpop.f32.mrb[0].mxu0
    %1258 = vmatprep.mubr.bf16.mxu0 0
    %1259 = vmatmul.mubr.bf16.gmra.mrb[0].mxu0 %v1119
    %v1260 = vpop.f32.mrb[0].mxu0
    %v1261 = vadd.f32 %v1144, %v1260
    %v1262 = vpop.f32.mrb[0].mxu0
    %v1263 = vpop.f32.mrb[0].mxu0
    %v1264 = vadd.f32 %v1144, %v1263
    %v1265 = vpop.f32.mrb[0].mxu0
    %1266 = vmatprep.mubr.bf16.mxu0 0
    %1267 = vmatmul.mubr.bf16.gmra.mrb[0].mxu0 %v1120
    %v1268 = vpop.f32.mrb[0].mxu0
    %v1269 = vadd.f32 %v1144, %v1268
    %v1270 = vpop.f32.mrb[0].mxu0
    %v1271 = vpop.f32.mrb[0].mxu0
    %v1272 = vadd.f32 %v1144, %v1271
    %v1273 = vpop.f32.mrb[0].mxu0
    %1274 = vmatprep.mubr.bf16.mxu0 0
    %1275 = vmatmul.mubr.bf16.gmra.mrb[0].mxu0 %v1121
    %v1276 = vpop.f32.mrb[0].mxu0
    %v1277 = vadd.f32 %v1144, %v1276
    %v1278 = vpop.f32.mrb[0].mxu0
    %v1279 = vpop.f32.mrb[0].mxu0
    %v1280 = vadd.f32 %v1144, %v1279
    %v1281 = vpop.f32.mrb[0].mxu0
    %1282 = vmatprep.mubr.bf16.mxu0 0
    %1283 = vmatmul.mubr.bf16.gmra.mrb[0].mxu0 %v1122
    %v1284 = vpop.f32.mrb[0].mxu0
    %v1285 = vadd.f32 %v1144, %v1284
    %v1286 = vpop.f32.mrb[0].mxu0
    %v1287 = vpop.f32.mrb[0].mxu0
    %v1288 = vadd.f32 %v1144, %v1287
    %v1289 = vpop.f32.mrb[0].mxu0
    %1290 = vdwg.mxu0
    %1291 = vst.msk [vmem:[#allocation3] sm:$0xff] %vm97, %v1229
    %1292 = vst.msk [vmem:[#allocation3 + $0x8] sm:$0xff] %vm97, %v1232
    %1293 = vst.msk [vmem:[#allocation3 + $0x10] sm:$0xff] %vm97, %v1237
    %1294 = vst.msk [vmem:[#allocation3 + $0x18] sm:$0xff] %vm97, %v1240
    %1295 = vst.msk [vmem:[#allocation3 + $0x20] sm:$0xff] %vm97, %v1245
    %1296 = vst.msk [vmem:[#allocation3 + $0x28] sm:$0xff] %vm97, %v1248
    %1297 = vst.msk [vmem:[#allocation3 + $0x30] sm:$0xff] %vm97, %v1253
    %1298 = vst.msk [vmem:[#allocation3 + $0x38] sm:$0xff] %vm97, %v1256
    %1299 = vst.msk [vmem:[#allocation3 + $0x40] sm:$0xff] %vm97, %v1261
    %1300 = vst.msk [vmem:[#allocation3 + $0x48] sm:$0xff] %vm97, %v1264
    %1301 = vst.msk [vmem:[#allocation3 + $0x50] sm:$0xff] %vm97, %v1269
    %1302 = vst.msk [vmem:[#allocation3 + $0x58] sm:$0xff] %vm97, %v1272
    %1303 = vst.msk [vmem:[#allocation3 + $0x60] sm:$0xff] %vm97, %v1277
    %1304 = vst.msk [vmem:[#allocation3 + $0x68] sm:$0xff] %vm97, %v1280
    %1305 = vst.msk [vmem:[#allocation3 + $0x70] sm:$0xff] %vm97, %v1285
    %1306 = vst.msk [vmem:[#allocation3 + $0x78] sm:$0xff] %vm97, %v1288
    // Predicated region
    $region38: #{feedforward.1} parent=1 // pred_check
      _
    $region39: #{feedforward.1} parent=1 // pred_check_branch
      %1308 = sbr.rel (0) target = $region41
    $region40: #{feedforward.1} parent=1 // pred_region
      %s1310 = ssub.s32 2048, 2048
      %1311 = vsyncadd [#allocation4], %s1310
      %s1312 = sshll.u32 [#allocation3], 4
      %s1313 = int_to_ptr.vmem [resolvable:$true] %s1312
      %1318 = dma.vmem_to_hbm [thread:$0]  %s1313, 2048, %s9, [#allocation4], 128, 128, 8
    $region41: #{feedforward.1} parent=1 // pred_fallthru
      _
    // Predicated region
    $region42: #{feedforward.1} parent=1 // pred_check
      _
    $region43: #{feedforward.1} parent=1 // pred_check_branch
      %1320 = sbr.rel (0) target = $region45
    $region44: #{feedforward.1} parent=1 // pred_region
      %1321 = dma.done [#allocation4], 2048
    $region45: #{feedforward.1} parent=1 // pred_fallthru
      _
    %1322 = vsyncpa [#allocation4], 1

</llo_original>
